<compile_context>
chip_gen: v5e
topology: v5e:2x2
jax: 0.10.0
libtpu: 0.0.40
codegen_flags: <defaults>
</compile_context>

<pallas_src>
import functools

import numpy as np
import jax
import jax.numpy as jnp
from jax.experimental import pallas as pl
from jax.experimental.pallas import tpu as pltpu

KSIZE = 7
PAD = 3
TAPS = KSIZE * KSIZE
LANE = 128


def cbam_kernel(w_planes_ref, w1t_ref, w2_ref, x_ref, o_ref, *, width, hw_true):
    """Fused CBAM forward for one (BT, C, HW_pad) block.

    w_planes_ref : VMEM (49, 2, HW_pad) f32 — per-tap spatial-conv weights with
                   the SAME-padding boundary mask (and pad-lane mask) pre-folded
                   in; index 0/1 of axis 1 = weight for the mean / max map.
    w1t_ref      : VMEM (C, Cr) f32 — ChannelAttention fc1 weight, transposed.
    w2_ref       : VMEM (C, Cr) f32 — ChannelAttention fc2 weight.
    x_ref/o_ref  : VMEM (BT, C, HW_pad) lane-dense input / output block.
    """
    bt, _, hw = x_ref.shape
    x = x_ref[...].astype(jnp.float32)                            # (BT, C, HW)
    # TODO(synk): for bf16 inputs on v6e/v7x keep the two rescales in bf16 and
    # upcast only the reductions / 49-tap accumulation (inputs here are f32).

    # ---------------- channel attention (tiny MLP, VPU-only) ----------------
    avg_c = jnp.sum(x, axis=2, keepdims=True) * (1.0 / hw_true)   # (BT, C, 1)
    if hw_true != hw:
        lane = jax.lax.broadcasted_iota(jnp.int32, (1, 1, hw), 2)
        x_m = jnp.where(lane < hw_true, x, jnp.finfo(jnp.float32).min)
        max_c = jnp.max(x_m, axis=2, keepdims=True)                # (BT, C, 1)
    else:
        max_c = jnp.max(x, axis=2, keepdims=True)                  # (BT, C, 1)

    # Both pooled vectors through the shared MLP in one pass (batch-concat);
    # broadcasts of the tiny weights are hoisted out of the two paths.
    pooled = jnp.concatenate([avg_c, max_c], axis=0)               # (2BT, C, 1)
    w1t = w1t_ref[...][None, :, :]                                 # (1, C, Cr)
    w2 = w2_ref[...][None, :, :]                                   # (1, C, Cr)
    h = jnp.maximum(jnp.sum(pooled * w1t, axis=1, keepdims=True), 0.0)  # (2BT,1,Cr)
    mlp = jnp.sum(h * w2, axis=2, keepdims=True)                   # (2BT, C, 1)
    ca = jax.nn.sigmoid(mlp[:bt] + mlp[bt:])                       # (BT, C, 1)

    # -------- spatial attention: channel reductions of (x * ca) --------
    # x*ca is consumed immediately by the two reductions; it is not kept live
    # across the tap loop (final store recomputes x * ca * attn from x_ref).
    xc = x * ca
    s_avg = jnp.mean(xc, axis=1, keepdims=True)                    # (BT, 1, HW)
    s_max = jnp.max(xc, axis=1, keepdims=True)                     # (BT, 1, HW)
    s_cat = jnp.concatenate([s_avg, s_max], axis=1)                # (BT, 2, HW)

    # 7x7 SAME conv as 49 static lane rolls of the stacked maps; boundary masks
    # are pre-folded into the weight planes, so each tap is one XLU roll plus
    # one VPU multiply-add into one of several independent accumulators.
    n_acc = 4 if bt <= 4 else 2
    accs = [jnp.zeros((bt, 2, hw), jnp.float32) for _ in range(n_acc)]
    tap = 0
    for ky in range(KSIZE):
        sy = ky - PAD
        for kx in range(KSIZE):
            sx = kx - PAD
            k = sy * width + sx                                    # flat shift
            shift = (-k) % hw
            rolled = s_cat if shift == 0 else pltpu.roll(s_cat, shift=shift, axis=2)
            wp = w_planes_ref[tap][None]                           # (1, 2, HW)
            accs[tap % n_acc] = accs[tap % n_acc] + rolled * wp
            tap += 1
    conv = accs[0]
    for a in accs[1:]:
        conv = conv + a
    conv = jnp.sum(conv, axis=1, keepdims=True)                    # (BT, 1, HW)
    attn = jax.nn.sigmoid(conv)

    # Fused write-back: x * ca * attn (no channel-rescaled block kept live).
    o_ref[...] = (x_ref[...].astype(jnp.float32) * ca * attn).astype(o_ref.dtype)


def _round_up(v, m):
    return (v + m - 1) // m * m


def _auto_batch_tile(batch, per_batch_bytes, target_bytes=1 << 20):
    """Largest divisor of `batch` giving blocks <= target while keeping the
    grid length >= 2 when possible (v7x has 2 TensorCores)."""
    cap = max(1, min(batch, target_bytes // max(per_batch_bytes, 1)))
    if batch >= 2:
        cap = min(cap, batch // 2)
    bt = 1
    for d in range(1, cap + 1):
        if batch % d == 0:
            bt = d
    return bt


def cbam(x, w_fc1, w_fc2, w_sp, *, batch_tile=None):
    """Fused CBAM forward.

    x     : (B, C, H, W)
    w_fc1 : (C//r, C, 1, 1)  ChannelAttention fc[0] (1x1 conv, no bias), OIHW
    w_fc2 : (C, C//r, 1, 1)  ChannelAttention fc[2] (1x1 conv, no bias), OIHW
    w_sp  : (1, 2, 7, 7)     SpatialAttention conv1 (no bias), OIHW
    """
    B, C, H, W = x.shape
    HW = H * W
    HW_pad = _round_up(HW, LANE)                 # keep lane-dense, unmasked vst
    Cr = w_fc1.shape[0]

    x_flat = x.reshape(B, C, HW)
    if HW_pad != HW:
        x_flat = jnp.pad(x_flat, ((0, 0), (0, 0), (0, HW_pad - HW)))

    w1t = jnp.asarray(w_fc1, jnp.float32).reshape(Cr, C).T          # (C, Cr)
    w2 = jnp.asarray(w_fc2, jnp.float32).reshape(C, Cr)             # (C, Cr)

    # Pre-fold the SAME-padding boundary mask (and pad-lane mask) into per-tap
    # weight planes: planes[t, c, p] = w_sp[0, c, ky, kx] if the tap is in
    # bounds at flattened output position p (< H*W), else 0.
    pos = np.arange(HW_pad)
    row, col = pos // W, pos % W
    in_range = pos < HW
    masks = np.zeros((TAPS, HW_pad), np.float32)
    t = 0
    for ky in range(KSIZE):
        sy = ky - PAD
        for kx in range(KSIZE):
            sx = kx - PAD
            ok = (in_range & (row + sy >= 0) & (row + sy < H)
                  & (col + sx >= 0) & (col + sx < W))
            masks[t] = ok.astype(np.float32)
            t += 1
    wsp_tc = jnp.asarray(w_sp, jnp.float32).reshape(2, TAPS).T      # (49, 2)
    w_planes = wsp_tc[:, :, None] * jnp.asarray(masks)[:, None, :]  # (49, 2, HW)

    per_batch_bytes = C * HW_pad * x.dtype.itemsize
    if batch_tile is None:
        batch_tile = _auto_batch_tile(B, per_batch_bytes)
    assert B % batch_tile == 0, (B, batch_tile)

    # VMEM budget: double-buffered in+out blocks + resident weights + headroom.
    block_bytes = batch_tile * per_batch_bytes
    vmem_needed = 4 * block_bytes + w_planes.size * 4 + 2 * C * Cr * 4 + (2 << 20)
    cp = dict(dimension_semantics=("parallel",))
    if vmem_needed > (32 << 20):
        cp["vmem_limit_bytes"] = int(min(vmem_needed, 64 << 20))

    kernel = functools.partial(cbam_kernel, width=W, hw_true=HW)

    out_flat = pl.pallas_call(
        kernel,
        out_shape=jax.ShapeDtypeStruct((B, C, HW_pad), x.dtype),
        grid_spec=pltpu.PrefetchScalarGridSpec(
            num_scalar_prefetch=0,
            grid=(B // batch_tile,),
            in_specs=[
                # Masked per-tap conv-weight planes, fully resident in VMEM.
                pl.BlockSpec((TAPS, 2, HW_pad), lambda b: (0, 0, 0)),
                # Tiny channel-MLP weights, fully resident.
                pl.BlockSpec((C, Cr), lambda b: (0, 0)),
                pl.BlockSpec((C, Cr), lambda b: (0, 0)),
                # batch_tile batch elements per grid step, lane-dense (C, HW).
                pl.BlockSpec((batch_tile, C, HW_pad), lambda b: (b, 0, 0)),
            ],
            out_specs=pl.BlockSpec((batch_tile, C, HW_pad), lambda b: (b, 0, 0)),
        ),
        compiler_params=pltpu.CompilerParams(**cp),
    )(w_planes, w1t, w2, x_flat)

    return out_flat[:, :, :HW].reshape(B, C, H, W)


def cbam_ref(x, w_fc1, w_fc2, w_sp):
    """Pure-JAX reference mirroring the PyTorch CBAM forward."""
    dn = ("NCHW", "OIHW", "NCHW")
    avg = jnp.mean(x, axis=(2, 3), keepdims=True)
    mx = jnp.max(x, axis=(2, 3), keepdims=True)

    def fc(v):
        h = jax.lax.conv_general_dilated(v, w_fc1, (1, 1), "VALID",
                                         dimension_numbers=dn)
        h = jnp.maximum(h, 0.0)
        return jax.lax.conv_general_dilated(h, w_fc2, (1, 1), "VALID",
                                            dimension_numbers=dn)

    x = x * jax.nn.sigmoid(fc(avg) + fc(mx))
    s_avg = jnp.mean(x, axis=1, keepdims=True)
    s_max = jnp.max(x, axis=1, keepdims=True)
    cat = jnp.concatenate([s_avg, s_max], axis=1)
    conv = jax.lax.conv_general_dilated(cat, w_sp, (1, 1),
                                        ((PAD, PAD), (PAD, PAD)),
                                        dimension_numbers=dn)
    return x * jax.nn.sigmoid(conv)


if __name__ == "__main__":
    key = jax.random.PRNGKey(0)
    kx, k1, k2, k3 = jax.random.split(key, 4)

    # channels=32 with the module's default reduction=16 (so C//r = 2 >= 1).
    B, C, reduction = 2, 32, 16
    Cr = C // reduction

    w_fc1 = 0.2 * jax.random.normal(k1, (Cr, C, 1, 1), dtype=jnp.float32)
    w_fc2 = 0.2 * jax.random.normal(k2, (C, Cr, 1, 1), dtype=jnp.float32)
    w_sp = 0.1 * jax.random.normal(k3, (1, 2, KSIZE, KSIZE), dtype=jnp.float32)

    # 16x16 = lane-aligned path; 14x14 exercises the HW-padding path.
    for (H, W) in ((16, 16), (14, 14)):
        x = jax.random.normal(kx, (B, C, H, W), dtype=jnp.float32)
        out = jax.block_until_ready(cbam(x, w_fc1, w_fc2, w_sp))
        ref = cbam_ref(x, w_fc1, w_fc2, w_sp)
        assert out.shape == ref.shape == (B, C, H, W)
        max_err = float(jnp.max(jnp.abs(out - ref)))
        assert max_err < 1e-4, (H, W, max_err)

    print("KERNEL_OK")
</pallas_src>

<mosaic_0001>
module attributes {stable_mosaic.version = 11 : i64} {
  func.func @cbam_kernel(%arg0: i32, %arg1: memref<49x2x256xf32, #tpu.memory_space<vmem>>, %arg2: memref<32x2xf32, #tpu.memory_space<vmem>>, %arg3: memref<32x2xf32, #tpu.memory_space<vmem>>, %arg4: memref<1x32x256xf32, #tpu.memory_space<vmem>>, %arg5: memref<1x32x256xf32, #tpu.memory_space<vmem>>) attributes {dimension_semantics = [#tpu.dimension_semantics<parallel>], iteration_bounds = array<i64: 2>, scalar_prefetch = 0 : i64, scratch_operands = 0 : i64, tpu.core_type = #tpu.core_type<tc>, window_params = [{pipeline_mode = #tpu.pipeline_mode<synchronous>, transform_indices = @transform_0, window_bounds = array<i64: 49, 2, 256>}, {pipeline_mode = #tpu.pipeline_mode<synchronous>, transform_indices = @transform_1, window_bounds = array<i64: 32, 2>}, {pipeline_mode = #tpu.pipeline_mode<synchronous>, transform_indices = @transform_2, window_bounds = array<i64: 32, 2>}, {transform_indices = @transform_3, window_bounds = array<i64: 1, 32, 256>}, {transform_indices = @transform_4, window_bounds = array<i64: 1, 32, 256>}]} {
    %c0 = arith.constant 0 : index
    %c0_0 = arith.constant 0 : index
    %c0_1 = arith.constant 0 : index
    %0 = vector.load %arg4[%c0, %c0_0, %c0_1] : memref<1x32x256xf32, #tpu.memory_space<vmem>>, vector<1x32x256xf32>
    %cst = arith.constant dense<0.000000e+00> : vector<1x32xf32>
    %1 = vector.multi_reduction <add>, %0, %cst [2] : vector<1x32x256xf32> to vector<1x32xf32>
    %2 = vector.shape_cast %1 : vector<1x32xf32> to vector<1x32x1xf32>
    %cst_2 = arith.constant 3.906250e-03 : f32
    %3 = vector.broadcast %cst_2 : f32 to vector<1x32x1xf32>
    %4 = arith.mulf %2, %3 : vector<1x32x1xf32>
    %cst_3 = arith.constant dense<0xFF800000> : vector<1x32xf32>
    %5 = vector.multi_reduction <maximumf>, %0, %cst_3 [2] : vector<1x32x256xf32> to vector<1x32xf32>
    %6 = vector.shape_cast %5 : vector<1x32xf32> to vector<1x32x1xf32>
    %7 = tpu.concatenate %4, %6 in 0 : vector<1x32x1xf32>, vector<1x32x1xf32> -> vector<2x32x1xf32>
    %c0_4 = arith.constant 0 : index
    %c0_5 = arith.constant 0 : index
    %8 = vector.load %arg2[%c0_4, %c0_5] : memref<32x2xf32, #tpu.memory_space<vmem>>, vector<32x2xf32>
    %9 = vector.shape_cast %8 : vector<32x2xf32> to vector<1x32x2xf32>
    %c0_6 = arith.constant 0 : index
    %c0_7 = arith.constant 0 : index
    %10 = vector.load %arg3[%c0_6, %c0_7] : memref<32x2xf32, #tpu.memory_space<vmem>>, vector<32x2xf32>
    %11 = vector.shape_cast %10 : vector<32x2xf32> to vector<1x32x2xf32>
    %12 = vector.broadcast %7 : vector<2x32x1xf32> to vector<2x32x2xf32>
    %13 = vector.broadcast %9 : vector<1x32x2xf32> to vector<2x32x2xf32>
    %14 = arith.mulf %12, %13 : vector<2x32x2xf32>
    %cst_8 = arith.constant dense<0.000000e+00> : vector<2x2xf32>
    %15 = vector.multi_reduction <add>, %14, %cst_8 [1] : vector<2x32x2xf32> to vector<2x2xf32>
    %16 = vector.shape_cast %15 : vector<2x2xf32> to vector<2x1x2xf32>
    %cst_9 = arith.constant 0.000000e+00 : f32
    %17 = vector.broadcast %cst_9 : f32 to vector<2x1x2xf32>
    %18 = arith.maximumf %16, %17 : vector<2x1x2xf32>
    %19 = vector.broadcast %18 : vector<2x1x2xf32> to vector<2x32x2xf32>
    %20 = vector.broadcast %11 : vector<1x32x2xf32> to vector<2x32x2xf32>
    %21 = arith.mulf %19, %20 : vector<2x32x2xf32>
    %cst_10 = arith.constant dense<0.000000e+00> : vector<2x32xf32>
    %22 = vector.multi_reduction <add>, %21, %cst_10 [2] : vector<2x32x2xf32> to vector<2x32xf32>
    %23 = vector.shape_cast %22 : vector<2x32xf32> to vector<2x32x1xf32>
    %24 = vector.extract_strided_slice %23 {offsets = [0, 0, 0], sizes = [1, 32, 1], strides = [1, 1, 1]} : vector<2x32x1xf32> to vector<1x32x1xf32>
    %25 = vector.extract_strided_slice %23 {offsets = [1, 0, 0], sizes = [1, 32, 1], strides = [1, 1, 1]} : vector<2x32x1xf32> to vector<1x32x1xf32>
    %26 = arith.addf %24, %25 : vector<1x32x1xf32>
    %27 = arith.negf %26 : vector<1x32x1xf32>
    %28 = math.exp %27 : vector<1x32x1xf32>
    %cst_11 = arith.constant 1.000000e+00 : f32
    %29 = vector.broadcast %cst_11 : f32 to vector<1x32x1xf32>
    %30 = arith.addf %29, %28 : vector<1x32x1xf32>
    %31 = arith.divf %29, %30 : vector<1x32x1xf32>
    %32 = vector.broadcast %31 : vector<1x32x1xf32> to vector<1x32x256xf32>
    %33 = arith.mulf %0, %32 : vector<1x32x256xf32>
    %cst_12 = arith.constant dense<0.000000e+00> : vector<1x256xf32>
    %34 = vector.multi_reduction <add>, %33, %cst_12 [1] : vector<1x32x256xf32> to vector<1x256xf32>
    %35 = vector.shape_cast %34 : vector<1x256xf32> to vector<1x1x256xf32>
    %cst_13 = arith.constant 3.200000e+01 : f32
    %36 = vector.broadcast %cst_13 : f32 to vector<1x1x256xf32>
    %37 = arith.divf %35, %36 : vector<1x1x256xf32>
    %cst_14 = arith.constant dense<0xFF800000> : vector<1x256xf32>
    %38 = vector.multi_reduction <maximumf>, %33, %cst_14 [1] : vector<1x32x256xf32> to vector<1x256xf32>
    %39 = vector.shape_cast %38 : vector<1x256xf32> to vector<1x1x256xf32>
    %40 = tpu.concatenate %37, %39 in 1 : vector<1x1x256xf32>, vector<1x1x256xf32> -> vector<1x2x256xf32>
    %cst_15 = arith.constant 0.000000e+00 : f32
    %41 = vector.broadcast %cst_15 : f32 to vector<1x2x256xf32>
    %cst_16 = arith.constant 0.000000e+00 : f32
    %42 = vector.broadcast %cst_16 : f32 to vector<1x2x256xf32>
    %cst_17 = arith.constant 0.000000e+00 : f32
    %43 = vector.broadcast %cst_17 : f32 to vector<1x2x256xf32>
    %cst_18 = arith.constant 0.000000e+00 : f32
    %44 = vector.broadcast %cst_18 : f32 to vector<1x2x256xf32>
    %c51_i32 = arith.constant 51 : i32
    %45 = tpu.dynamic_rotate %40 by %c51_i32 dim 2 : vector<1x2x256xf32>, i32 -> vector<1x2x256xf32>
    %c0_19 = arith.constant 0 : index
    %c0_20 = arith.constant 0 : index
    %c0_21 = arith.constant 0 : index
    %46 = vector.load %arg1[%c0_19, %c0_20, %c0_21] : memref<49x2x256xf32, #tpu.memory_space<vmem>>, vector<1x2x256xf32>
    %47 = vector.shape_cast %46 : vector<1x2x256xf32> to vector<2x256xf32>
    %48 = vector.shape_cast %47 : vector<2x256xf32> to vector<1x2x256xf32>
    %49 = arith.mulf %45, %48 : vector<1x2x256xf32>
    %50 = arith.addf %41, %49 : vector<1x2x256xf32>
    %c50_i32 = arith.constant 50 : i32
    %51 = tpu.dynamic_rotate %40 by %c50_i32 dim 2 : vector<1x2x256xf32>, i32 -> vector<1x2x256xf32>
    %c1 = arith.constant 1 : index
    %c0_22 = arith.constant 0 : index
    %c0_23 = arith.constant 0 : index
    %52 = vector.load %arg1[%c1, %c0_22, %c0_23] : memref<49x2x256xf32, #tpu.memory_space<vmem>>, vector<1x2x256xf32>
    %53 = vector.shape_cast %52 : vector<1x2x256xf32> to vector<2x256xf32>
    %54 = vector.shape_cast %53 : vector<2x256xf32> to vector<1x2x256xf32>
    %55 = arith.mulf %51, %54 : vector<1x2x256xf32>
    %56 = arith.addf %42, %55 : vector<1x2x256xf32>
    %c49_i32 = arith.constant 49 : i32
    %57 = tpu.dynamic_rotate %40 by %c49_i32 dim 2 : vector<1x2x256xf32>, i32 -> vector<1x2x256xf32>
    %c2 = arith.constant 2 : index
    %c0_24 = arith.constant 0 : index
    %c0_25 = arith.constant 0 : index
    %58 = vector.load %arg1[%c2, %c0_24, %c0_25] : memref<49x2x256xf32, #tpu.memory_space<vmem>>, vector<1x2x256xf32>
    %59 = vector.shape_cast %58 : vector<1x2x256xf32> to vector<2x256xf32>
    %60 = vector.shape_cast %59 : vector<2x256xf32> to vector<1x2x256xf32>
    %61 = arith.mulf %57, %60 : vector<1x2x256xf32>
    %62 = arith.addf %43, %61 : vector<1x2x256xf32>
    %c48_i32 = arith.constant 48 : i32
    %63 = tpu.dynamic_rotate %40 by %c48_i32 dim 2 : vector<1x2x256xf32>, i32 -> vector<1x2x256xf32>
    %c3 = arith.constant 3 : index
    %c0_26 = arith.constant 0 : index
    %c0_27 = arith.constant 0 : index
    %64 = vector.load %arg1[%c3, %c0_26, %c0_27] : memref<49x2x256xf32, #tpu.memory_space<vmem>>, vector<1x2x256xf32>
    %65 = vector.shape_cast %64 : vector<1x2x256xf32> to vector<2x256xf32>
    %66 = vector.shape_cast %65 : vector<2x256xf32> to vector<1x2x256xf32>
    %67 = arith.mulf %63, %66 : vector<1x2x256xf32>
    %68 = arith.addf %44, %67 : vector<1x2x256xf32>
    %c47_i32 = arith.constant 47 : i32
    %69 = tpu.dynamic_rotate %40 by %c47_i32 dim 2 : vector<1x2x256xf32>, i32 -> vector<1x2x256xf32>
    %c4 = arith.constant 4 : index
    %c0_28 = arith.constant 0 : index
    %c0_29 = arith.constant 0 : index
    %70 = vector.load %arg1[%c4, %c0_28, %c0_29] : memref<49x2x256xf32, #tpu.memory_space<vmem>>, vector<1x2x256xf32>
    %71 = vector.shape_cast %70 : vector<1x2x256xf32> to vector<2x256xf32>
    %72 = vector.shape_cast %71 : vector<2x256xf32> to vector<1x2x256xf32>
    %73 = arith.mulf %69, %72 : vector<1x2x256xf32>
    %74 = arith.addf %50, %73 : vector<1x2x256xf32>
    %c46_i32 = arith.constant 46 : i32
    %75 = tpu.dynamic_rotate %40 by %c46_i32 dim 2 : vector<1x2x256xf32>, i32 -> vector<1x2x256xf32>
    %c5 = arith.constant 5 : index
    %c0_30 = arith.constant 0 : index
    %c0_31 = arith.constant 0 : index
    %76 = vector.load %arg1[%c5, %c0_30, %c0_31] : memref<49x2x256xf32, #tpu.memory_space<vmem>>, vector<1x2x256xf32>
    %77 = vector.shape_cast %76 : vector<1x2x256xf32> to vector<2x256xf32>
    %78 = vector.shape_cast %77 : vector<2x256xf32> to vector<1x2x256xf32>
    %79 = arith.mulf %75, %78 : vector<1x2x256xf32>
    %80 = arith.addf %56, %79 : vector<1x2x256xf32>
    %c45_i32 = arith.constant 45 : i32
    %81 = tpu.dynamic_rotate %40 by %c45_i32 dim 2 : vector<1x2x256xf32>, i32 -> vector<1x2x256xf32>
    %c6 = arith.constant 6 : index
    %c0_32 = arith.constant 0 : index
    %c0_33 = arith.constant 0 : index
    %82 = vector.load %arg1[%c6, %c0_32, %c0_33] : memref<49x2x256xf32, #tpu.memory_space<vmem>>, vector<1x2x256xf32>
    %83 = vector.shape_cast %82 : vector<1x2x256xf32> to vector<2x256xf32>
    %84 = vector.shape_cast %83 : vector<2x256xf32> to vector<1x2x256xf32>
    %85 = arith.mulf %81, %84 : vector<1x2x256xf32>
    %86 = arith.addf %62, %85 : vector<1x2x256xf32>
    %c35_i32 = arith.constant 35 : i32
    %87 = tpu.dynamic_rotate %40 by %c35_i32 dim 2 : vector<1x2x256xf32>, i32 -> vector<1x2x256xf32>
    %c7 = arith.constant 7 : index
    %c0_34 = arith.constant 0 : index
    %c0_35 = arith.constant 0 : index
    %88 = vector.load %arg1[%c7, %c0_34, %c0_35] : memref<49x2x256xf32, #tpu.memory_space<vmem>>, vector<1x2x256xf32>
    %89 = vector.shape_cast %88 : vector<1x2x256xf32> to vector<2x256xf32>
    %90 = vector.shape_cast %89 : vector<2x256xf32> to vector<1x2x256xf32>
    %91 = arith.mulf %87, %90 : vector<1x2x256xf32>
    %92 = arith.addf %68, %91 : vector<1x2x256xf32>
    %c34_i32 = arith.constant 34 : i32
    %93 = tpu.dynamic_rotate %40 by %c34_i32 dim 2 : vector<1x2x256xf32>, i32 -> vector<1x2x256xf32>
    %c8 = arith.constant 8 : index
    %c0_36 = arith.constant 0 : index
    %c0_37 = arith.constant 0 : index
    %94 = vector.load %arg1[%c8, %c0_36, %c0_37] : memref<49x2x256xf32, #tpu.memory_space<vmem>>, vector<1x2x256xf32>
    %95 = vector.shape_cast %94 : vector<1x2x256xf32> to vector<2x256xf32>
    %96 = vector.shape_cast %95 : vector<2x256xf32> to vector<1x2x256xf32>
    %97 = arith.mulf %93, %96 : vector<1x2x256xf32>
    %98 = arith.addf %74, %97 : vector<1x2x256xf32>
    %c33_i32 = arith.constant 33 : i32
    %99 = tpu.dynamic_rotate %40 by %c33_i32 dim 2 : vector<1x2x256xf32>, i32 -> vector<1x2x256xf32>
    %c9 = arith.constant 9 : index
    %c0_38 = arith.constant 0 : index
    %c0_39 = arith.constant 0 : index
    %100 = vector.load %arg1[%c9, %c0_38, %c0_39] : memref<49x2x256xf32, #tpu.memory_space<vmem>>, vector<1x2x256xf32>
    %101 = vector.shape_cast %100 : vector<1x2x256xf32> to vector<2x256xf32>
    %102 = vector.shape_cast %101 : vector<2x256xf32> to vector<1x2x256xf32>
    %103 = arith.mulf %99, %102 : vector<1x2x256xf32>
    %104 = arith.addf %80, %103 : vector<1x2x256xf32>
    %c32_i32 = arith.constant 32 : i32
    %105 = tpu.dynamic_rotate %40 by %c32_i32 dim 2 : vector<1x2x256xf32>, i32 -> vector<1x2x256xf32>
    %c10 = arith.constant 10 : index
    %c0_40 = arith.constant 0 : index
    %c0_41 = arith.constant 0 : index
    %106 = vector.load %arg1[%c10, %c0_40, %c0_41] : memref<49x2x256xf32, #tpu.memory_space<vmem>>, vector<1x2x256xf32>
    %107 = vector.shape_cast %106 : vector<1x2x256xf32> to vector<2x256xf32>
    %108 = vector.shape_cast %107 : vector<2x256xf32> to vector<1x2x256xf32>
    %109 = arith.mulf %105, %108 : vector<1x2x256xf32>
    %110 = arith.addf %86, %109 : vector<1x2x256xf32>
    %c31_i32 = arith.constant 31 : i32
    %111 = tpu.dynamic_rotate %40 by %c31_i32 dim 2 : vector<1x2x256xf32>, i32 -> vector<1x2x256xf32>
    %c11 = arith.constant 11 : index
    %c0_42 = arith.constant 0 : index
    %c0_43 = arith.constant 0 : index
    %112 = vector.load %arg1[%c11, %c0_42, %c0_43] : memref<49x2x256xf32, #tpu.memory_space<vmem>>, vector<1x2x256xf32>
    %113 = vector.shape_cast %112 : vector<1x2x256xf32> to vector<2x256xf32>
    %114 = vector.shape_cast %113 : vector<2x256xf32> to vector<1x2x256xf32>
    %115 = arith.mulf %111, %114 : vector<1x2x256xf32>
    %116 = arith.addf %92, %115 : vector<1x2x256xf32>
    %c30_i32 = arith.constant 30 : i32
    %117 = tpu.dynamic_rotate %40 by %c30_i32 dim 2 : vector<1x2x256xf32>, i32 -> vector<1x2x256xf32>
    %c12 = arith.constant 12 : index
    %c0_44 = arith.constant 0 : index
    %c0_45 = arith.constant 0 : index
    %118 = vector.load %arg1[%c12, %c0_44, %c0_45] : memref<49x2x256xf32, #tpu.memory_space<vmem>>, vector<1x2x256xf32>
    %119 = vector.shape_cast %118 : vector<1x2x256xf32> to vector<2x256xf32>
    %120 = vector.shape_cast %119 : vector<2x256xf32> to vector<1x2x256xf32>
    %121 = arith.mulf %117, %120 : vector<1x2x256xf32>
    %122 = arith.addf %98, %121 : vector<1x2x256xf32>
    %c29_i32 = arith.constant 29 : i32
    %123 = tpu.dynamic_rotate %40 by %c29_i32 dim 2 : vector<1x2x256xf32>, i32 -> vector<1x2x256xf32>
    %c13 = arith.constant 13 : index
    %c0_46 = arith.constant 0 : index
    %c0_47 = arith.constant 0 : index
    %124 = vector.load %arg1[%c13, %c0_46, %c0_47] : memref<49x2x256xf32, #tpu.memory_space<vmem>>, vector<1x2x256xf32>
    %125 = vector.shape_cast %124 : vector<1x2x256xf32> to vector<2x256xf32>
    %126 = vector.shape_cast %125 : vector<2x256xf32> to vector<1x2x256xf32>
    %127 = arith.mulf %123, %126 : vector<1x2x256xf32>
    %128 = arith.addf %104, %127 : vector<1x2x256xf32>
    %c19_i32 = arith.constant 19 : i32
    %129 = tpu.dynamic_rotate %40 by %c19_i32 dim 2 : vector<1x2x256xf32>, i32 -> vector<1x2x256xf32>
    %c14 = arith.constant 14 : index
    %c0_48 = arith.constant 0 : index
    %c0_49 = arith.constant 0 : index
    %130 = vector.load %arg1[%c14, %c0_48, %c0_49] : memref<49x2x256xf32, #tpu.memory_space<vmem>>, vector<1x2x256xf32>
    %131 = vector.shape_cast %130 : vector<1x2x256xf32> to vector<2x256xf32>
    %132 = vector.shape_cast %131 : vector<2x256xf32> to vector<1x2x256xf32>
    %133 = arith.mulf %129, %132 : vector<1x2x256xf32>
    %134 = arith.addf %110, %133 : vector<1x2x256xf32>
    %c18_i32 = arith.constant 18 : i32
    %135 = tpu.dynamic_rotate %40 by %c18_i32 dim 2 : vector<1x2x256xf32>, i32 -> vector<1x2x256xf32>
    %c15 = arith.constant 15 : index
    %c0_50 = arith.constant 0 : index
    %c0_51 = arith.constant 0 : index
    %136 = vector.load %arg1[%c15, %c0_50, %c0_51] : memref<49x2x256xf32, #tpu.memory_space<vmem>>, vector<1x2x256xf32>
    %137 = vector.shape_cast %136 : vector<1x2x256xf32> to vector<2x256xf32>
    %138 = vector.shape_cast %137 : vector<2x256xf32> to vector<1x2x256xf32>
    %139 = arith.mulf %135, %138 : vector<1x2x256xf32>
    %140 = arith.addf %116, %139 : vector<1x2x256xf32>
    %c17_i32 = arith.constant 17 : i32
    %141 = tpu.dynamic_rotate %40 by %c17_i32 dim 2 : vector<1x2x256xf32>, i32 -> vector<1x2x256xf32>
    %c16 = arith.constant 16 : index
    %c0_52 = arith.constant 0 : index
    %c0_53 = arith.constant 0 : index
    %142 = vector.load %arg1[%c16, %c0_52, %c0_53] : memref<49x2x256xf32, #tpu.memory_space<vmem>>, vector<1x2x256xf32>
    %143 = vector.shape_cast %142 : vector<1x2x256xf32> to vector<2x256xf32>
    %144 = vector.shape_cast %143 : vector<2x256xf32> to vector<1x2x256xf32>
    %145 = arith.mulf %141, %144 : vector<1x2x256xf32>
    %146 = arith.addf %122, %145 : vector<1x2x256xf32>
    %c16_i32 = arith.constant 16 : i32
    %147 = tpu.dynamic_rotate %40 by %c16_i32 dim 2 : vector<1x2x256xf32>, i32 -> vector<1x2x256xf32>
    %c17 = arith.constant 17 : index
    %c0_54 = arith.constant 0 : index
    %c0_55 = arith.constant 0 : index
    %148 = vector.load %arg1[%c17, %c0_54, %c0_55] : memref<49x2x256xf32, #tpu.memory_space<vmem>>, vector<1x2x256xf32>
    %149 = vector.shape_cast %148 : vector<1x2x256xf32> to vector<2x256xf32>
    %150 = vector.shape_cast %149 : vector<2x256xf32> to vector<1x2x256xf32>
    %151 = arith.mulf %147, %150 : vector<1x2x256xf32>
    %152 = arith.addf %128, %151 : vector<1x2x256xf32>
    %c15_i32 = arith.constant 15 : i32
    %153 = tpu.dynamic_rotate %40 by %c15_i32 dim 2 : vector<1x2x256xf32>, i32 -> vector<1x2x256xf32>
    %c18 = arith.constant 18 : index
    %c0_56 = arith.constant 0 : index
    %c0_57 = arith.constant 0 : index
    %154 = vector.load %arg1[%c18, %c0_56, %c0_57] : memref<49x2x256xf32, #tpu.memory_space<vmem>>, vector<1x2x256xf32>
    %155 = vector.shape_cast %154 : vector<1x2x256xf32> to vector<2x256xf32>
    %156 = vector.shape_cast %155 : vector<2x256xf32> to vector<1x2x256xf32>
    %157 = arith.mulf %153, %156 : vector<1x2x256xf32>
    %158 = arith.addf %134, %157 : vector<1x2x256xf32>
    %c14_i32 = arith.constant 14 : i32
    %159 = tpu.dynamic_rotate %40 by %c14_i32 dim 2 : vector<1x2x256xf32>, i32 -> vector<1x2x256xf32>
    %c19 = arith.constant 19 : index
    %c0_58 = arith.constant 0 : index
    %c0_59 = arith.constant 0 : index
    %160 = vector.load %arg1[%c19, %c0_58, %c0_59] : memref<49x2x256xf32, #tpu.memory_space<vmem>>, vector<1x2x256xf32>
    %161 = vector.shape_cast %160 : vector<1x2x256xf32> to vector<2x256xf32>
    %162 = vector.shape_cast %161 : vector<2x256xf32> to vector<1x2x256xf32>
    %163 = arith.mulf %159, %162 : vector<1x2x256xf32>
    %164 = arith.addf %140, %163 : vector<1x2x256xf32>
    %c13_i32 = arith.constant 13 : i32
    %165 = tpu.dynamic_rotate %40 by %c13_i32 dim 2 : vector<1x2x256xf32>, i32 -> vector<1x2x256xf32>
    %c20 = arith.constant 20 : index
    %c0_60 = arith.constant 0 : index
    %c0_61 = arith.constant 0 : index
    %166 = vector.load %arg1[%c20, %c0_60, %c0_61] : memref<49x2x256xf32, #tpu.memory_space<vmem>>, vector<1x2x256xf32>
    %167 = vector.shape_cast %166 : vector<1x2x256xf32> to vector<2x256xf32>
    %168 = vector.shape_cast %167 : vector<2x256xf32> to vector<1x2x256xf32>
    %169 = arith.mulf %165, %168 : vector<1x2x256xf32>
    %170 = arith.addf %146, %169 : vector<1x2x256xf32>
    %c3_i32 = arith.constant 3 : i32
    %171 = tpu.dynamic_rotate %40 by %c3_i32 dim 2 : vector<1x2x256xf32>, i32 -> vector<1x2x256xf32>
    %c21 = arith.constant 21 : index
    %c0_62 = arith.constant 0 : index
    %c0_63 = arith.constant 0 : index
    %172 = vector.load %arg1[%c21, %c0_62, %c0_63] : memref<49x2x256xf32, #tpu.memory_space<vmem>>, vector<1x2x256xf32>
    %173 = vector.shape_cast %172 : vector<1x2x256xf32> to vector<2x256xf32>
    %174 = vector.shape_cast %173 : vector<2x256xf32> to vector<1x2x256xf32>
    %175 = arith.mulf %171, %174 : vector<1x2x256xf32>
    %176 = arith.addf %152, %175 : vector<1x2x256xf32>
    %c2_i32 = arith.constant 2 : i32
    %177 = tpu.dynamic_rotate %40 by %c2_i32 dim 2 : vector<1x2x256xf32>, i32 -> vector<1x2x256xf32>
    %c22 = arith.constant 22 : index
    %c0_64 = arith.constant 0 : index
    %c0_65 = arith.constant 0 : index
    %178 = vector.load %arg1[%c22, %c0_64, %c0_65] : memref<49x2x256xf32, #tpu.memory_space<vmem>>, vector<1x2x256xf32>
    %179 = vector.shape_cast %178 : vector<1x2x256xf32> to vector<2x256xf32>
    %180 = vector.shape_cast %179 : vector<2x256xf32> to vector<1x2x256xf32>
    %181 = arith.mulf %177, %180 : vector<1x2x256xf32>
    %182 = arith.addf %158, %181 : vector<1x2x256xf32>
    %c1_i32 = arith.constant 1 : i32
    %183 = tpu.dynamic_rotate %40 by %c1_i32 dim 2 : vector<1x2x256xf32>, i32 -> vector<1x2x256xf32>
    %c23 = arith.constant 23 : index
    %c0_66 = arith.constant 0 : index
    %c0_67 = arith.constant 0 : index
    %184 = vector.load %arg1[%c23, %c0_66, %c0_67] : memref<49x2x256xf32, #tpu.memory_space<vmem>>, vector<1x2x256xf32>
    %185 = vector.shape_cast %184 : vector<1x2x256xf32> to vector<2x256xf32>
    %186 = vector.shape_cast %185 : vector<2x256xf32> to vector<1x2x256xf32>
    %187 = arith.mulf %183, %186 : vector<1x2x256xf32>
    %188 = arith.addf %164, %187 : vector<1x2x256xf32>
    %c24 = arith.constant 24 : index
    %c0_68 = arith.constant 0 : index
    %c0_69 = arith.constant 0 : index
    %189 = vector.load %arg1[%c24, %c0_68, %c0_69] : memref<49x2x256xf32, #tpu.memory_space<vmem>>, vector<1x2x256xf32>
    %190 = vector.shape_cast %189 : vector<1x2x256xf32> to vector<2x256xf32>
    %191 = vector.shape_cast %190 : vector<2x256xf32> to vector<1x2x256xf32>
    %192 = arith.mulf %40, %191 : vector<1x2x256xf32>
    %193 = arith.addf %170, %192 : vector<1x2x256xf32>
    %c255_i32 = arith.constant 255 : i32
    %194 = tpu.dynamic_rotate %40 by %c255_i32 dim 2 : vector<1x2x256xf32>, i32 -> vector<1x2x256xf32>
    %c25 = arith.constant 25 : index
    %c0_70 = arith.constant 0 : index
    %c0_71 = arith.constant 0 : index
    %195 = vector.load %arg1[%c25, %c0_70, %c0_71] : memref<49x2x256xf32, #tpu.memory_space<vmem>>, vector<1x2x256xf32>
    %196 = vector.shape_cast %195 : vector<1x2x256xf32> to vector<2x256xf32>
    %197 = vector.shape_cast %196 : vector<2x256xf32> to vector<1x2x256xf32>
    %198 = arith.mulf %194, %197 : vector<1x2x256xf32>
    %199 = arith.addf %176, %198 : vector<1x2x256xf32>
    %c254_i32 = arith.constant 254 : i32
    %200 = tpu.dynamic_rotate %40 by %c254_i32 dim 2 : vector<1x2x256xf32>, i32 -> vector<1x2x256xf32>
    %c26 = arith.constant 26 : index
    %c0_72 = arith.constant 0 : index
    %c0_73 = arith.constant 0 : index
    %201 = vector.load %arg1[%c26, %c0_72, %c0_73] : memref<49x2x256xf32, #tpu.memory_space<vmem>>, vector<1x2x256xf32>
    %202 = vector.shape_cast %201 : vector<1x2x256xf32> to vector<2x256xf32>
    %203 = vector.shape_cast %202 : vector<2x256xf32> to vector<1x2x256xf32>
    %204 = arith.mulf %200, %203 : vector<1x2x256xf32>
    %205 = arith.addf %182, %204 : vector<1x2x256xf32>
    %c253_i32 = arith.constant 253 : i32
    %206 = tpu.dynamic_rotate %40 by %c253_i32 dim 2 : vector<1x2x256xf32>, i32 -> vector<1x2x256xf32>
    %c27 = arith.constant 27 : index
    %c0_74 = arith.constant 0 : index
    %c0_75 = arith.constant 0 : index
    %207 = vector.load %arg1[%c27, %c0_74, %c0_75] : memref<49x2x256xf32, #tpu.memory_space<vmem>>, vector<1x2x256xf32>
    %208 = vector.shape_cast %207 : vector<1x2x256xf32> to vector<2x256xf32>
    %209 = vector.shape_cast %208 : vector<2x256xf32> to vector<1x2x256xf32>
    %210 = arith.mulf %206, %209 : vector<1x2x256xf32>
    %211 = arith.addf %188, %210 : vector<1x2x256xf32>
    %c243_i32 = arith.constant 243 : i32
    %212 = tpu.dynamic_rotate %40 by %c243_i32 dim 2 : vector<1x2x256xf32>, i32 -> vector<1x2x256xf32>
    %c28 = arith.constant 28 : index
    %c0_76 = arith.constant 0 : index
    %c0_77 = arith.constant 0 : index
    %213 = vector.load %arg1[%c28, %c0_76, %c0_77] : memref<49x2x256xf32, #tpu.memory_space<vmem>>, vector<1x2x256xf32>
    %214 = vector.shape_cast %213 : vector<1x2x256xf32> to vector<2x256xf32>
    %215 = vector.shape_cast %214 : vector<2x256xf32> to vector<1x2x256xf32>
    %216 = arith.mulf %212, %215 : vector<1x2x256xf32>
    %217 = arith.addf %193, %216 : vector<1x2x256xf32>
    %c242_i32 = arith.constant 242 : i32
    %218 = tpu.dynamic_rotate %40 by %c242_i32 dim 2 : vector<1x2x256xf32>, i32 -> vector<1x2x256xf32>
    %c29 = arith.constant 29 : index
    %c0_78 = arith.constant 0 : index
    %c0_79 = arith.constant 0 : index
    %219 = vector.load %arg1[%c29, %c0_78, %c0_79] : memref<49x2x256xf32, #tpu.memory_space<vmem>>, vector<1x2x256xf32>
    %220 = vector.shape_cast %219 : vector<1x2x256xf32> to vector<2x256xf32>
    %221 = vector.shape_cast %220 : vector<2x256xf32> to vector<1x2x256xf32>
    %222 = arith.mulf %218, %221 : vector<1x2x256xf32>
    %223 = arith.addf %199, %222 : vector<1x2x256xf32>
    %c241_i32 = arith.constant 241 : i32
    %224 = tpu.dynamic_rotate %40 by %c241_i32 dim 2 : vector<1x2x256xf32>, i32 -> vector<1x2x256xf32>
    %c30 = arith.constant 30 : index
    %c0_80 = arith.constant 0 : index
    %c0_81 = arith.constant 0 : index
    %225 = vector.load %arg1[%c30, %c0_80, %c0_81] : memref<49x2x256xf32, #tpu.memory_space<vmem>>, vector<1x2x256xf32>
    %226 = vector.shape_cast %225 : vector<1x2x256xf32> to vector<2x256xf32>
    %227 = vector.shape_cast %226 : vector<2x256xf32> to vector<1x2x256xf32>
    %228 = arith.mulf %224, %227 : vector<1x2x256xf32>
    %229 = arith.addf %205, %228 : vector<1x2x256xf32>
    %c240_i32 = arith.constant 240 : i32
    %230 = tpu.dynamic_rotate %40 by %c240_i32 dim 2 : vector<1x2x256xf32>, i32 -> vector<1x2x256xf32>
    %c31 = arith.constant 31 : index
    %c0_82 = arith.constant 0 : index
    %c0_83 = arith.constant 0 : index
    %231 = vector.load %arg1[%c31, %c0_82, %c0_83] : memref<49x2x256xf32, #tpu.memory_space<vmem>>, vector<1x2x256xf32>
    %232 = vector.shape_cast %231 : vector<1x2x256xf32> to vector<2x256xf32>
    %233 = vector.shape_cast %232 : vector<2x256xf32> to vector<1x2x256xf32>
    %234 = arith.mulf %230, %233 : vector<1x2x256xf32>
    %235 = arith.addf %211, %234 : vector<1x2x256xf32>
    %c239_i32 = arith.constant 239 : i32
    %236 = tpu.dynamic_rotate %40 by %c239_i32 dim 2 : vector<1x2x256xf32>, i32 -> vector<1x2x256xf32>
    %c32 = arith.constant 32 : index
    %c0_84 = arith.constant 0 : index
    %c0_85 = arith.constant 0 : index
    %237 = vector.load %arg1[%c32, %c0_84, %c0_85] : memref<49x2x256xf32, #tpu.memory_space<vmem>>, vector<1x2x256xf32>
    %238 = vector.shape_cast %237 : vector<1x2x256xf32> to vector<2x256xf32>
    %239 = vector.shape_cast %238 : vector<2x256xf32> to vector<1x2x256xf32>
    %240 = arith.mulf %236, %239 : vector<1x2x256xf32>
    %241 = arith.addf %217, %240 : vector<1x2x256xf32>
    %c238_i32 = arith.constant 238 : i32
    %242 = tpu.dynamic_rotate %40 by %c238_i32 dim 2 : vector<1x2x256xf32>, i32 -> vector<1x2x256xf32>
    %c33 = arith.constant 33 : index
    %c0_86 = arith.constant 0 : index
    %c0_87 = arith.constant 0 : index
    %243 = vector.load %arg1[%c33, %c0_86, %c0_87] : memref<49x2x256xf32, #tpu.memory_space<vmem>>, vector<1x2x256xf32>
    %244 = vector.shape_cast %243 : vector<1x2x256xf32> to vector<2x256xf32>
    %245 = vector.shape_cast %244 : vector<2x256xf32> to vector<1x2x256xf32>
    %246 = arith.mulf %242, %245 : vector<1x2x256xf32>
    %247 = arith.addf %223, %246 : vector<1x2x256xf32>
    %c237_i32 = arith.constant 237 : i32
    %248 = tpu.dynamic_rotate %40 by %c237_i32 dim 2 : vector<1x2x256xf32>, i32 -> vector<1x2x256xf32>
    %c34 = arith.constant 34 : index
    %c0_88 = arith.constant 0 : index
    %c0_89 = arith.constant 0 : index
    %249 = vector.load %arg1[%c34, %c0_88, %c0_89] : memref<49x2x256xf32, #tpu.memory_space<vmem>>, vector<1x2x256xf32>
    %250 = vector.shape_cast %249 : vector<1x2x256xf32> to vector<2x256xf32>
    %251 = vector.shape_cast %250 : vector<2x256xf32> to vector<1x2x256xf32>
    %252 = arith.mulf %248, %251 : vector<1x2x256xf32>
    %253 = arith.addf %229, %252 : vector<1x2x256xf32>
    %c227_i32 = arith.constant 227 : i32
    %254 = tpu.dynamic_rotate %40 by %c227_i32 dim 2 : vector<1x2x256xf32>, i32 -> vector<1x2x256xf32>
    %c35 = arith.constant 35 : index
    %c0_90 = arith.constant 0 : index
    %c0_91 = arith.constant 0 : index
    %255 = vector.load %arg1[%c35, %c0_90, %c0_91] : memref<49x2x256xf32, #tpu.memory_space<vmem>>, vector<1x2x256xf32>
    %256 = vector.shape_cast %255 : vector<1x2x256xf32> to vector<2x256xf32>
    %257 = vector.shape_cast %256 : vector<2x256xf32> to vector<1x2x256xf32>
    %258 = arith.mulf %254, %257 : vector<1x2x256xf32>
    %259 = arith.addf %235, %258 : vector<1x2x256xf32>
    %c226_i32 = arith.constant 226 : i32
    %260 = tpu.dynamic_rotate %40 by %c226_i32 dim 2 : vector<1x2x256xf32>, i32 -> vector<1x2x256xf32>
    %c36 = arith.constant 36 : index
    %c0_92 = arith.constant 0 : index
    %c0_93 = arith.constant 0 : index
    %261 = vector.load %arg1[%c36, %c0_92, %c0_93] : memref<49x2x256xf32, #tpu.memory_space<vmem>>, vector<1x2x256xf32>
    %262 = vector.shape_cast %261 : vector<1x2x256xf32> to vector<2x256xf32>
    %263 = vector.shape_cast %262 : vector<2x256xf32> to vector<1x2x256xf32>
    %264 = arith.mulf %260, %263 : vector<1x2x256xf32>
    %265 = arith.addf %241, %264 : vector<1x2x256xf32>
    %c225_i32 = arith.constant 225 : i32
    %266 = tpu.dynamic_rotate %40 by %c225_i32 dim 2 : vector<1x2x256xf32>, i32 -> vector<1x2x256xf32>
    %c37 = arith.constant 37 : index
    %c0_94 = arith.constant 0 : index
    %c0_95 = arith.constant 0 : index
    %267 = vector.load %arg1[%c37, %c0_94, %c0_95] : memref<49x2x256xf32, #tpu.memory_space<vmem>>, vector<1x2x256xf32>
    %268 = vector.shape_cast %267 : vector<1x2x256xf32> to vector<2x256xf32>
    %269 = vector.shape_cast %268 : vector<2x256xf32> to vector<1x2x256xf32>
    %270 = arith.mulf %266, %269 : vector<1x2x256xf32>
    %271 = arith.addf %247, %270 : vector<1x2x256xf32>
    %c224_i32 = arith.constant 224 : i32
    %272 = tpu.dynamic_rotate %40 by %c224_i32 dim 2 : vector<1x2x256xf32>, i32 -> vector<1x2x256xf32>
    %c38 = arith.constant 38 : index
    %c0_96 = arith.constant 0 : index
    %c0_97 = arith.constant 0 : index
    %273 = vector.load %arg1[%c38, %c0_96, %c0_97] : memref<49x2x256xf32, #tpu.memory_space<vmem>>, vector<1x2x256xf32>
    %274 = vector.shape_cast %273 : vector<1x2x256xf32> to vector<2x256xf32>
    %275 = vector.shape_cast %274 : vector<2x256xf32> to vector<1x2x256xf32>
    %276 = arith.mulf %272, %275 : vector<1x2x256xf32>
    %277 = arith.addf %253, %276 : vector<1x2x256xf32>
    %c223_i32 = arith.constant 223 : i32
    %278 = tpu.dynamic_rotate %40 by %c223_i32 dim 2 : vector<1x2x256xf32>, i32 -> vector<1x2x256xf32>
    %c39 = arith.constant 39 : index
    %c0_98 = arith.constant 0 : index
    %c0_99 = arith.constant 0 : index
    %279 = vector.load %arg1[%c39, %c0_98, %c0_99] : memref<49x2x256xf32, #tpu.memory_space<vmem>>, vector<1x2x256xf32>
    %280 = vector.shape_cast %279 : vector<1x2x256xf32> to vector<2x256xf32>
    %281 = vector.shape_cast %280 : vector<2x256xf32> to vector<1x2x256xf32>
    %282 = arith.mulf %278, %281 : vector<1x2x256xf32>
    %283 = arith.addf %259, %282 : vector<1x2x256xf32>
    %c222_i32 = arith.constant 222 : i32
    %284 = tpu.dynamic_rotate %40 by %c222_i32 dim 2 : vector<1x2x256xf32>, i32 -> vector<1x2x256xf32>
    %c40 = arith.constant 40 : index
    %c0_100 = arith.constant 0 : index
    %c0_101 = arith.constant 0 : index
    %285 = vector.load %arg1[%c40, %c0_100, %c0_101] : memref<49x2x256xf32, #tpu.memory_space<vmem>>, vector<1x2x256xf32>
    %286 = vector.shape_cast %285 : vector<1x2x256xf32> to vector<2x256xf32>
    %287 = vector.shape_cast %286 : vector<2x256xf32> to vector<1x2x256xf32>
    %288 = arith.mulf %284, %287 : vector<1x2x256xf32>
    %289 = arith.addf %265, %288 : vector<1x2x256xf32>
    %c221_i32 = arith.constant 221 : i32
    %290 = tpu.dynamic_rotate %40 by %c221_i32 dim 2 : vector<1x2x256xf32>, i32 -> vector<1x2x256xf32>
    %c41 = arith.constant 41 : index
    %c0_102 = arith.constant 0 : index
    %c0_103 = arith.constant 0 : index
    %291 = vector.load %arg1[%c41, %c0_102, %c0_103] : memref<49x2x256xf32, #tpu.memory_space<vmem>>, vector<1x2x256xf32>
    %292 = vector.shape_cast %291 : vector<1x2x256xf32> to vector<2x256xf32>
    %293 = vector.shape_cast %292 : vector<2x256xf32> to vector<1x2x256xf32>
    %294 = arith.mulf %290, %293 : vector<1x2x256xf32>
    %295 = arith.addf %271, %294 : vector<1x2x256xf32>
    %c211_i32 = arith.constant 211 : i32
    %296 = tpu.dynamic_rotate %40 by %c211_i32 dim 2 : vector<1x2x256xf32>, i32 -> vector<1x2x256xf32>
    %c42 = arith.constant 42 : index
    %c0_104 = arith.constant 0 : index
    %c0_105 = arith.constant 0 : index
    %297 = vector.load %arg1[%c42, %c0_104, %c0_105] : memref<49x2x256xf32, #tpu.memory_space<vmem>>, vector<1x2x256xf32>
    %298 = vector.shape_cast %297 : vector<1x2x256xf32> to vector<2x256xf32>
    %299 = vector.shape_cast %298 : vector<2x256xf32> to vector<1x2x256xf32>
    %300 = arith.mulf %296, %299 : vector<1x2x256xf32>
    %301 = arith.addf %277, %300 : vector<1x2x256xf32>
    %c210_i32 = arith.constant 210 : i32
    %302 = tpu.dynamic_rotate %40 by %c210_i32 dim 2 : vector<1x2x256xf32>, i32 -> vector<1x2x256xf32>
    %c43 = arith.constant 43 : index
    %c0_106 = arith.constant 0 : index
    %c0_107 = arith.constant 0 : index
    %303 = vector.load %arg1[%c43, %c0_106, %c0_107] : memref<49x2x256xf32, #tpu.memory_space<vmem>>, vector<1x2x256xf32>
    %304 = vector.shape_cast %303 : vector<1x2x256xf32> to vector<2x256xf32>
    %305 = vector.shape_cast %304 : vector<2x256xf32> to vector<1x2x256xf32>
    %306 = arith.mulf %302, %305 : vector<1x2x256xf32>
    %307 = arith.addf %283, %306 : vector<1x2x256xf32>
    %c209_i32 = arith.constant 209 : i32
    %308 = tpu.dynamic_rotate %40 by %c209_i32 dim 2 : vector<1x2x256xf32>, i32 -> vector<1x2x256xf32>
    %c44 = arith.constant 44 : index
    %c0_108 = arith.constant 0 : index
    %c0_109 = arith.constant 0 : index
    %309 = vector.load %arg1[%c44, %c0_108, %c0_109] : memref<49x2x256xf32, #tpu.memory_space<vmem>>, vector<1x2x256xf32>
    %310 = vector.shape_cast %309 : vector<1x2x256xf32> to vector<2x256xf32>
    %311 = vector.shape_cast %310 : vector<2x256xf32> to vector<1x2x256xf32>
    %312 = arith.mulf %308, %311 : vector<1x2x256xf32>
    %313 = arith.addf %289, %312 : vector<1x2x256xf32>
    %c208_i32 = arith.constant 208 : i32
    %314 = tpu.dynamic_rotate %40 by %c208_i32 dim 2 : vector<1x2x256xf32>, i32 -> vector<1x2x256xf32>
    %c45 = arith.constant 45 : index
    %c0_110 = arith.constant 0 : index
    %c0_111 = arith.constant 0 : index
    %315 = vector.load %arg1[%c45, %c0_110, %c0_111] : memref<49x2x256xf32, #tpu.memory_space<vmem>>, vector<1x2x256xf32>
    %316 = vector.shape_cast %315 : vector<1x2x256xf32> to vector<2x256xf32>
    %317 = vector.shape_cast %316 : vector<2x256xf32> to vector<1x2x256xf32>
    %318 = arith.mulf %314, %317 : vector<1x2x256xf32>
    %319 = arith.addf %295, %318 : vector<1x2x256xf32>
    %c207_i32 = arith.constant 207 : i32
    %320 = tpu.dynamic_rotate %40 by %c207_i32 dim 2 : vector<1x2x256xf32>, i32 -> vector<1x2x256xf32>
    %c46 = arith.constant 46 : index
    %c0_112 = arith.constant 0 : index
    %c0_113 = arith.constant 0 : index
    %321 = vector.load %arg1[%c46, %c0_112, %c0_113] : memref<49x2x256xf32, #tpu.memory_space<vmem>>, vector<1x2x256xf32>
    %322 = vector.shape_cast %321 : vector<1x2x256xf32> to vector<2x256xf32>
    %323 = vector.shape_cast %322 : vector<2x256xf32> to vector<1x2x256xf32>
    %324 = arith.mulf %320, %323 : vector<1x2x256xf32>
    %325 = arith.addf %301, %324 : vector<1x2x256xf32>
    %c206_i32 = arith.constant 206 : i32
    %326 = tpu.dynamic_rotate %40 by %c206_i32 dim 2 : vector<1x2x256xf32>, i32 -> vector<1x2x256xf32>
    %c47 = arith.constant 47 : index
    %c0_114 = arith.constant 0 : index
    %c0_115 = arith.constant 0 : index
    %327 = vector.load %arg1[%c47, %c0_114, %c0_115] : memref<49x2x256xf32, #tpu.memory_space<vmem>>, vector<1x2x256xf32>
    %328 = vector.shape_cast %327 : vector<1x2x256xf32> to vector<2x256xf32>
    %329 = vector.shape_cast %328 : vector<2x256xf32> to vector<1x2x256xf32>
    %330 = arith.mulf %326, %329 : vector<1x2x256xf32>
    %331 = arith.addf %307, %330 : vector<1x2x256xf32>
    %c205_i32 = arith.constant 205 : i32
    %332 = tpu.dynamic_rotate %40 by %c205_i32 dim 2 : vector<1x2x256xf32>, i32 -> vector<1x2x256xf32>
    %c48 = arith.constant 48 : index
    %c0_116 = arith.constant 0 : index
    %c0_117 = arith.constant 0 : index
    %333 = vector.load %arg1[%c48, %c0_116, %c0_117] : memref<49x2x256xf32, #tpu.memory_space<vmem>>, vector<1x2x256xf32>
    %334 = vector.shape_cast %333 : vector<1x2x256xf32> to vector<2x256xf32>
    %335 = vector.shape_cast %334 : vector<2x256xf32> to vector<1x2x256xf32>
    %336 = arith.mulf %332, %335 : vector<1x2x256xf32>
    %337 = arith.addf %313, %336 : vector<1x2x256xf32>
    %338 = arith.addf %337, %319 : vector<1x2x256xf32>
    %339 = arith.addf %338, %325 : vector<1x2x256xf32>
    %340 = arith.addf %339, %331 : vector<1x2x256xf32>
    %cst_118 = arith.constant dense<0.000000e+00> : vector<1x256xf32>
    %341 = vector.multi_reduction <add>, %340, %cst_118 [1] : vector<1x2x256xf32> to vector<1x256xf32>
    %342 = vector.shape_cast %341 : vector<1x256xf32> to vector<1x1x256xf32>
    %343 = arith.negf %342 : vector<1x1x256xf32>
    %344 = math.exp %343 : vector<1x1x256xf32>
    %cst_119 = arith.constant 1.000000e+00 : f32
    %345 = vector.broadcast %cst_119 : f32 to vector<1x1x256xf32>
    %346 = arith.addf %345, %344 : vector<1x1x256xf32>
    %347 = arith.divf %345, %346 : vector<1x1x256xf32>
    %c0_120 = arith.constant 0 : index
    %c0_121 = arith.constant 0 : index
    %c0_122 = arith.constant 0 : index
    %348 = vector.load %arg4[%c0_120, %c0_121, %c0_122] : memref<1x32x256xf32, #tpu.memory_space<vmem>>, vector<1x32x256xf32>
    %349 = vector.broadcast %31 : vector<1x32x1xf32> to vector<1x32x256xf32>
    %350 = arith.mulf %348, %349 : vector<1x32x256xf32>
    %351 = vector.broadcast %347 : vector<1x1x256xf32> to vector<1x32x256xf32>
    %352 = arith.mulf %350, %351 : vector<1x32x256xf32>
    %c0_123 = arith.constant 0 : index
    %c0_124 = arith.constant 0 : index
    %c0_125 = arith.constant 0 : index
    %353 = vector.load %arg5[%c0_123, %c0_124, %c0_125] : memref<1x32x256xf32, #tpu.memory_space<vmem>>, vector<1x32x256xf32>
    tpu.vector_store %arg5[%c0_123, %c0_124, %c0_125], %352 {strides = array<i32>} : memref<1x32x256xf32, #tpu.memory_space<vmem>>, vector<1x32x256xf32>,
    return
  }
  func.func @transform_0(%arg0: i32) -> (i32, i32, i32) {
    %c0_i32 = arith.constant 0 : i32
    %c0_i32_0 = arith.constant 0 : i32
    %c0_i32_1 = arith.constant 0 : i32
    %c0_i32_2 = arith.constant 0 : i32
    return %c0_i32, %c0_i32_0, %c0_i32_1 : i32, i32, i32
  }
  func.func @transform_1(%arg0: i32) -> (i32, i32) {
    %c0_i32 = arith.constant 0 : i32
    %c0_i32_0 = arith.constant 0 : i32
    %c0_i32_1 = arith.constant 0 : i32
    return %c0_i32, %c0_i32_0 : i32, i32
  }
  func.func @transform_2(%arg0: i32) -> (i32, i32) {
    %c0_i32 = arith.constant 0 : i32
    %c0_i32_0 = arith.constant 0 : i32
    %c0_i32_1 = arith.constant 0 : i32
    return %c0_i32, %c0_i32_0 : i32, i32
  }
  func.func @transform_3(%arg0: i32) -> (i32, i32, i32) {
    %c0_i32 = arith.constant 0 : i32
    %c0_i32_0 = arith.constant 0 : i32
    %c0_i32_1 = arith.constant 0 : i32
    return %arg0, %c0_i32, %c0_i32_0 : i32, i32, i32
  }
  func.func @transform_4(%arg0: i32) -> (i32, i32, i32) {
    %c0_i32 = arith.constant 0 : i32
    %c0_i32_0 = arith.constant 0 : i32
    %c0_i32_1 = arith.constant 0 : i32
    return %arg0, %c0_i32, %c0_i32_0 : i32, i32, i32
  }
}

</mosaic_0001>

<llo_original>
// kernel: tpu_custom_call.1
$region0: #{tpu_custom_call.1}
  #allocation0 [shape = 'u32[]', space=smem, size = 0x4, offset = 0x4, fixed_abs, tag = 'smem constant byte address 0x4 - core index']
  #allocation1 [shape = 'u32[72,128]{1,0:T(1,128)}', space=vmem, size = 0x9000, scoped, tag = 'internal scratch']
  %s0 = inlined_call_operand.hbm [shape: f32[49,2,256], index: 0, kind: input, shape index: {}]
  %s1 = inlined_call_operand.vmem [shape: f32[32,2], index: 1, kind: input, shape index: {}]
  %s2 = inlined_call_operand.vmem [shape: f32[32,2], index: 2, kind: input, shape index: {}]
  %s3 = inlined_call_operand.hbm [shape: f32[2,32,256], index: 3, kind: input, shape index: {}]
  %s4 = inlined_call_operand.hbm [shape: f32[2,32,256], index: 4, kind: output, shape index: {}]
  %s5 = sld [smem:[#allocation0]]
  $region57: #{tpu_custom_call.1} parent=0
    _
  %s7 = ssub.s32 1, %s5
  %s8 = scalar_select 0, %s7, %s5
  $region1: #{tpu_custom_call.1} parent=0
    #allocation2 [shape = 'u8[100352]{0}', space=vmem, size = 0x18800, scoped, tag = 'input window, operand 0, single buffered']
    #allocation3 [shape = 's32[2]{0}', space=sflag, size = 0x8, scoped, tag = 'scoped memory for tpu_custom_call.1']
    #allocation4 [shape = 's32[2]{0}', space=sflag, size = 0x8, scoped, tag = 'scoped memory for tpu_custom_call.1']
    #allocation5 [shape = 'u8[65536]{0}', space=vmem, size = 0x10000, scoped, tag = 'input window, operand 3']
    #allocation6 [shape = 's32[2]{0}', space=sflag, size = 0x8, scoped, tag = 'scoped memory for tpu_custom_call.1']
    #allocation7 [shape = 'u8[65536]{0}', space=vmem, size = 0x10000, scoped, tag = 'output window, operand 0']
    %9 = vsyncpa [#allocation3], 0
    %10 = vsyncpa [#allocation6], 0
    %s11 = scalar_lea.sflag [#allocation6], 1
    %12 = vsyncpa %s11, 0
    %13 = vsyncpa [#allocation4], 0
    %s14 = scalar_lea.sflag [#allocation4], 1
    %15 = vsyncpa %s14, 0
    loop: start=0, step=1, limit=4
    $region2: #{tpu_custom_call.1} parent=1 // loop_pre_header
      _
    $region3: #{tpu_custom_call.1} parent=1 // loop_header
      %s17 = sphi 0, %s21
      %p18 = scmp.ge.s32.totalorder %s17, 4
      %s25 = sphi 0, %s25
      %s27 = sphi 0, %s25
      %s28 = sphi 0, %s27
      %s42 = sphi 0, %s28
      %s46 = sphi 0, %s46
      %s48 = sphi 0, %s46
      %s49 = sphi 0, %s48
      %s63 = sphi 0, %s49
      %s67 = sphi 0, %s67
      %s69 = sphi 0, %s67
      %s70 = sphi 0, %s69
      %s84 = sphi 0, %s70
      %s90 = sphi 0, %s92
      %s93 = sphi 0, %s90
      %s94 = sphi 0, %s93
      %s110 = sphi 0, %s94
      %s116 = sphi 0, %s118
      %s119 = sphi 0, %s116
      %s120 = sphi 0, %s119
      %s136 = sphi 0, %s120
    $region4: #{tpu_custom_call.1} parent=1 // loop_header_branch
      %20 = sbr.rel (%p18) target = $region8
    $region5: #{tpu_custom_call.1} parent=1 // loop_body
      %s22 = ssub.s32 %s17, 1
      %s23 = ssub.s32 %s17, 2
      %s24 = sadd.s32 %s17, 1
      %s26 = sadd.s32 %s25, 1
      %p29 = scmp.eq.s32.totalorder %s17, 1
      %p30 = scmp.ne.s32.totalorder %s25, %s27
      %p31 = scmp.eq.s32.totalorder %s17, 0
      %p32 = por %p30, %p31
      %p33 = scmp.ne.s32.totalorder %s25, %s27
      %p34 = scmp.eq.s32.totalorder %s22, 1
      %p35 = por %p33, %p34
      %p36 = scmp.ne.s32.totalorder %s27, %s28
      %p37 = scmp.eq.s32.totalorder %s22, 0
      %p38 = por %p36, %p37
      %p39 = scmp.ne.s32.totalorder %s27, %s28
      %p40 = scmp.eq.s32.totalorder %s23, 1
      %p41 = por %p39, %p40
      %p43 = scmp.ne.s32.totalorder %s28, %s42
      %p44 = scmp.eq.s32.totalorder %s23, 0
      %p45 = por %p43, %p44
      %s47 = sadd.s32 %s46, 1
      %p50 = scmp.eq.s32.totalorder %s17, 1
      %p51 = scmp.ne.s32.totalorder %s46, %s48
      %p52 = scmp.eq.s32.totalorder %s17, 0
      %p53 = por %p51, %p52
      %p54 = scmp.ne.s32.totalorder %s46, %s48
      %p55 = scmp.eq.s32.totalorder %s22, 1
      %p56 = por %p54, %p55
      %p57 = scmp.ne.s32.totalorder %s48, %s49
      %p58 = scmp.eq.s32.totalorder %s22, 0
      %p59 = por %p57, %p58
      %p60 = scmp.ne.s32.totalorder %s48, %s49
      %p61 = scmp.eq.s32.totalorder %s23, 1
      %p62 = por %p60, %p61
      %p64 = scmp.ne.s32.totalorder %s49, %s63
      %p65 = scmp.eq.s32.totalorder %s23, 0
      %p66 = por %p64, %p65
      %s68 = sadd.s32 %s67, 1
      %p71 = scmp.eq.s32.totalorder %s17, 1
      %p72 = scmp.ne.s32.totalorder %s67, %s69
      %p73 = scmp.eq.s32.totalorder %s17, 0
      %p74 = por %p72, %p73
      %p75 = scmp.ne.s32.totalorder %s67, %s69
      %p76 = scmp.eq.s32.totalorder %s22, 1
      %p77 = por %p75, %p76
      %p78 = scmp.ne.s32.totalorder %s69, %s70
      %p79 = scmp.eq.s32.totalorder %s22, 0
      %p80 = por %p78, %p79
      %p81 = scmp.ne.s32.totalorder %s69, %s70
      %p82 = scmp.eq.s32.totalorder %s23, 1
      %p83 = por %p81, %p82
      %p85 = scmp.ne.s32.totalorder %s70, %s84
      %p86 = scmp.eq.s32.totalorder %s23, 0
      %p87 = por %p85, %p86
      %s88 = ssub.s32 %s17, %s24
      %p89 = scmp.eq.s32.totalorder %s88, 0
      %s91 = sadd.s32 %s90, 1
      %s92 = scalar_select %p89, %s90, %s91
      %p95 = pneg %p89
      %p96 = scmp.eq.s32.totalorder %s17, 1
      %p97 = por %p95, %p96
      %p98 = scmp.ne.s32.totalorder %s90, %s93
      %p99 = scmp.eq.s32.totalorder %s17, 0
      %p100 = por %p98, %p99
      %p101 = scmp.ne.s32.totalorder %s90, %s93
      %p102 = scmp.eq.s32.totalorder %s22, 1
      %p103 = por %p101, %p102
      %p104 = scmp.ne.s32.totalorder %s93, %s94
      %p105 = scmp.eq.s32.totalorder %s22, 0
      %p106 = por %p104, %p105
      %p107 = scmp.ne.s32.totalorder %s93, %s94
      %p108 = scmp.eq.s32.totalorder %s23, 1
      %p109 = por %p107, %p108
      %p111 = scmp.ne.s32.totalorder %s94, %s110
      %p112 = scmp.eq.s32.totalorder %s23, 0
      %p113 = por %p111, %p112
      %s114 = ssub.s32 %s17, %s24
      %p115 = scmp.eq.s32.totalorder %s114, 0
      %s117 = sadd.s32 %s116, 1
      %s118 = scalar_select %p115, %s116, %s117
      %p121 = pneg %p115
      %p122 = scmp.eq.s32.totalorder %s17, 1
      %p123 = por %p121, %p122
      %p124 = scmp.ne.s32.totalorder %s116, %s119
      %p125 = scmp.eq.s32.totalorder %s17, 0
      %p126 = por %p124, %p125
      %p127 = scmp.ne.s32.totalorder %s116, %s119
      %p128 = scmp.eq.s32.totalorder %s22, 1
      %p129 = por %p127, %p128
      %p130 = scmp.ne.s32.totalorder %s119, %s120
      %p131 = scmp.eq.s32.totalorder %s22, 0
      %p132 = por %p130, %p131
      %p133 = scmp.ne.s32.totalorder %s119, %s120
      %p134 = scmp.eq.s32.totalorder %s23, 1
      %p135 = por %p133, %p134
      %p137 = scmp.ne.s32.totalorder %s120, %s136
      %p138 = scmp.eq.s32.totalorder %s23, 0
      %p139 = por %p137, %p138
      %p140 = scmp.le.s32.totalorder 1, %s17
      %p141 = scmp.lt.s32.totalorder %s17, 3
      %p142 = pnand %p140, %p141
      %p143 = pneg %p142
      // Predicated region
      $region9: #{tpu_custom_call.1} parent=5 // pred_check
        _
      $region10: #{tpu_custom_call.1} parent=5 // pred_check_branch
        %145 = sbr.rel (%p142) target = $region12
      $region11: #{tpu_custom_call.1} parent=5 // pred_region
        %s146 = ssub.s32 %s17, 1
        // Predicated region
        $region13: #{tpu_custom_call.1} parent=11 // pred_check
          %p147 = pneg %p38
        $region14: #{tpu_custom_call.1} parent=11 // pred_check_branch
          %149 = sbr.rel (%p147) target = $region16
        $region15: #{tpu_custom_call.1} parent=11 // pred_region
          %151 = vsyncadd [#allocation3], 0
          %s152 = sshll.u32 %s0, 4
          %s153 = int_to_ptr.hbm [resolvable:$true] %s152
          %s154 = sshll.u32 [#allocation2], 4
          %s155 = int_to_ptr.vmem [resolvable:$true] %s154
          %160 = dma.hbm_to_vmem [thread:$0]  %s153, 3136, %s155, [#allocation3], 64, 64, 4
        $region16: #{tpu_custom_call.1} parent=11 // pred_fallthru
          _
        // Predicated region
        $region17: #{tpu_custom_call.1} parent=11 // pred_check
          %p161 = pneg %p59
        $region18: #{tpu_custom_call.1} parent=11 // pred_check_branch
          %163 = sbr.rel (%p161) target = $region20
        $region19: #{tpu_custom_call.1} parent=11 // pred_region
          _
        $region20: #{tpu_custom_call.1} parent=11 // pred_fallthru
          _
        // Predicated region
        $region21: #{tpu_custom_call.1} parent=11 // pred_check
          %p164 = pneg %p80
        $region22: #{tpu_custom_call.1} parent=11 // pred_check_branch
          %166 = sbr.rel (%p164) target = $region24
        $region23: #{tpu_custom_call.1} parent=11 // pred_region
          _
        $region24: #{tpu_custom_call.1} parent=11 // pred_fallthru
          _
      $region12: #{tpu_custom_call.1} parent=5 // pred_fallthru
        _
      %p167 = scmp.lt.s32.totalorder %s17, 2
      // Predicated region
      $region25: #{tpu_custom_call.1} parent=5 // pred_check
        %p168 = pneg %p167
      $region26: #{tpu_custom_call.1} parent=5 // pred_check_branch
        %170 = sbr.rel (%p168) target = $region28
      $region27: #{tpu_custom_call.1} parent=5 // pred_region
        // Predicated region
        $region29: #{tpu_custom_call.1} parent=27 // pred_check
          %p171 = pneg %p100
        $region30: #{tpu_custom_call.1} parent=27 // pred_check_branch
          %173 = sbr.rel (%p171) target = $region32
        $region31: #{tpu_custom_call.1} parent=27 // pred_region
          %s174 = sand.u32 %s90, 1
          %s175 = scalar_lea.sflag [#allocation6], %s174
          %s176 = sand.u32 %s90, 1
          %s177 = smul.addr %s176, 64
          %s178 = scalar_lea.vmem [#allocation5], %s177
          %180 = vsyncadd %s175, 0
          %s181 = smul.addr %s17, 8
          %s182 = smul.addr %s181, 8
          %s183 = scalar_lea.hbm %s3, %s182
          %s184 = sshll.u32 %s183, 4
          %s185 = int_to_ptr.hbm [resolvable:$true] %s184
          %s186 = sshll.u32 %s178, 4
          %s187 = int_to_ptr.vmem [resolvable:$true] %s186
          %192 = dma.hbm_to_vmem [thread:$0]  %s185, 1024, %s187, %s175, 256, 256, 16
        $region32: #{tpu_custom_call.1} parent=27 // pred_fallthru
          _
      $region28: #{tpu_custom_call.1} parent=5 // pred_fallthru
        _
      %p193 = scmp.le.s32.totalorder 1, %s17
      %p194 = scmp.lt.s32.totalorder %s17, 3
      %p195 = pnand %p193, %p194
      %p196 = pneg %p195
      // Predicated region
      $region33: #{tpu_custom_call.1} parent=5 // pred_check
        _
      $region34: #{tpu_custom_call.1} parent=5 // pred_check_branch
        %198 = sbr.rel (%p195) target = $region36
      $region35: #{tpu_custom_call.1} parent=5 // pred_region
        %s199 = ssub.s32 %s17, 1
        // Predicated region
        $region37: #{tpu_custom_call.1} parent=35 // pred_check
          %p200 = pneg %p38
        $region38: #{tpu_custom_call.1} parent=35 // pred_check_branch
          %202 = sbr.rel (%p200) target = $region40
        $region39: #{tpu_custom_call.1} parent=35 // pred_region
          %204 = dma.done [#allocation3], 3136
        $region40: #{tpu_custom_call.1} parent=35 // pred_fallthru
          _
        %s205 = sand.u32 %s93, 1
        %s206 = scalar_lea.sflag [#allocation6], %s205
        %s207 = sand.u32 %s93, 1
        %s208 = smul.addr %s207, 64
        %s209 = scalar_lea.vmem [#allocation5], %s208
        // Predicated region
        $region41: #{tpu_custom_call.1} parent=35 // pred_check
          %p210 = pneg %p106
        $region42: #{tpu_custom_call.1} parent=35 // pred_check_branch
          %212 = sbr.rel (%p210) target = $region44
        $region43: #{tpu_custom_call.1} parent=35 // pred_region
          %214 = dma.done %s206, 1024
        $region44: #{tpu_custom_call.1} parent=35 // pred_fallthru
          _
        %p215 = pneg %p38
        %p216 = pneg %p35
        %p217 = pneg %p59
        %p218 = pneg %p56
        %p219 = pneg %p80
        %p220 = pneg %p77
        %s221 = sand.u32 %s93, 1
        %s222 = scalar_lea.sflag [#allocation6], %s221
        %s223 = sand.u32 %s93, 1
        %s224 = smul.addr %s223, 64
        %s225 = scalar_lea.vmem [#allocation5], %s224
        %p226 = pneg %p106
        %p227 = pneg %p103
        %p228 = pneg %p132
        %p229 = pneg %p129
        %s230 = sand.u32 %s119, 1
        %s231 = scalar_lea.sflag [#allocation4], %s230
        %s232 = sand.u32 %s119, 1
        %s233 = smul.addr %s232, 64
        %s234 = scalar_lea.vmem [#allocation7], %s233
        %v235 = vld [vmem:[%s209] sm:$0xff]
        %v236 = vld [vmem:[%s209 + $0x8] sm:$0xff]
        %v237 = vld [vmem:[%s209 + $0x10] sm:$0xff]
        %v238 = vld [vmem:[%s209 + $0x18] sm:$0xff]
        %v239 = vld [vmem:[%s209 + $0x20] sm:$0xff]
        %v240 = vld [vmem:[%s209 + $0x28] sm:$0xff]
        %v241 = vld [vmem:[%s209 + $0x30] sm:$0xff]
        %v242 = vld [vmem:[%s209 + $0x38] sm:$0xff]
        %v243 = vadd.f32 %v235, %v236
        %244 = vadd.xlane.f32.xlu0 %v243
        %v245 = vpop.xlane.xlu0 %244
        %v246 = vadd.f32 %v237, %v238
        %247 = vadd.xlane.f32.xlu0 %v246
        %v248 = vpop.xlane.xlu0 %247
        %v249 = vadd.f32 %v239, %v240
        %250 = vadd.xlane.f32.xlu0 %v249
        %v251 = vpop.xlane.xlu0 %250
        %v252 = vadd.f32 %v241, %v242
        %253 = vadd.xlane.f32.xlu0 %v252
        %v254 = vpop.xlane.xlu0 %253
        %v255 = vmul.f32 %v245, 0.00390625
        %v256 = vmul.f32 %v248, 0.00390625
        %v257 = vmul.f32 %v251, 0.00390625
        %v258 = vmul.f32 %v254, 0.00390625
        %v259 = vmax.f32 %v235, %v236
        %260 = vmax.xlane.f32.xlu0 %v259
        %v261 = vpop.xlane.xlu0 %260
        %v262 = vmax.f32 %v237, %v238
        %263 = vmax.xlane.f32.xlu0 %v262
        %v264 = vpop.xlane.xlu0 %263
        %v265 = vmax.f32 %v239, %v240
        %266 = vmax.xlane.f32.xlu0 %v265
        %v267 = vpop.xlane.xlu0 %266
        %v268 = vmax.f32 %v241, %v242
        %269 = vmax.xlane.f32.xlu0 %v268
        %v270 = vpop.xlane.xlu0 %269
        %v271 = vld [vmem:[%s1] sm:$0xff]
        %v272 = vld [vmem:[%s1 + $0x8] sm:$0xff]
        %v273 = vld [vmem:[%s1 + $0x10] sm:$0xff]
        %v274 = vld [vmem:[%s1 + $0x18] sm:$0xff]
        %v275 = vld [vmem:[%s2] sm:$0xff]
        %v276 = vld [vmem:[%s2 + $0x8] sm:$0xff]
        %v277 = vld [vmem:[%s2 + $0x10] sm:$0xff]
        %v278 = vld [vmem:[%s2 + $0x18] sm:$0xff]
        %280 = vset.pattern.permute.xlu0 0
        %281 = vperm.xlu0 %280, %v255
        %v282 = vpop.permute.xlu0 %281
        %285 = vset.pattern.permute.xlu0 0
        %286 = vperm.xlu0 %285, %v256
        %v287 = vpop.permute.xlu0 %286
        %290 = vset.pattern.permute.xlu0 0
        %291 = vperm.xlu0 %290, %v257
        %v292 = vpop.permute.xlu0 %291
        %295 = vset.pattern.permute.xlu0 0
        %296 = vperm.xlu0 %295, %v258
        %v297 = vpop.permute.xlu0 %296
        %300 = vset.pattern.permute.xlu0 0
        %301 = vperm.xlu0 %300, %v261
        %v302 = vpop.permute.xlu0 %301
        %305 = vset.pattern.permute.xlu0 0
        %306 = vperm.xlu0 %305, %v264
        %v307 = vpop.permute.xlu0 %306
        %310 = vset.pattern.permute.xlu0 0
        %311 = vperm.xlu0 %310, %v267
        %v312 = vpop.permute.xlu0 %311
        %315 = vset.pattern.permute.xlu0 0
        %316 = vperm.xlu0 %315, %v270
        %v317 = vpop.permute.xlu0 %316
        %v319 = vmul.f32 %v282, %v271
        %v320 = vmul.f32 %v287, %v272
        %v321 = vmul.f32 %v292, %v273
        %v322 = vmul.f32 %v297, %v274
        %v323 = vmul.f32 %v302, %v271
        %v324 = vmul.f32 %v307, %v272
        %v325 = vmul.f32 %v312, %v273
        %v326 = vmul.f32 %v317, %v274
        %vm327 = vcmask 15360
        %v328 = vsel %vm327, %v319, 0.0
        %v329 = vsel %vm327, %v320, 0.0
        %v330 = vadd.f32 %v328, %v329
        %v331 = vsel %vm327, %v321, 0.0
        %v332 = vadd.f32 %v330, %v331
        %v333 = vsel %vm327, %v322, 0.0
        %v334 = vadd.f32 %v332, %v333
        %v335 = vrot.slane %v334, 4
        %v336 = vadd.f32 %v334, %v335
        %v337 = vrot.slane %v336, 2
        %v338 = vadd.f32 %v336, %v337
        %v339 = vrot.slane %v338, 1
        %v340 = vadd.f32 %v338, %v339
        %v341 = vsel %vm327, %v323, 0.0
        %v342 = vsel %vm327, %v324, 0.0
        %v343 = vadd.f32 %v341, %v342
        %v344 = vsel %vm327, %v325, 0.0
        %v345 = vadd.f32 %v343, %v344
        %v346 = vsel %vm327, %v326, 0.0
        %v347 = vadd.f32 %v345, %v346
        %v348 = vrot.slane %v347, 4
        %v349 = vadd.f32 %v347, %v348
        %v350 = vrot.slane %v349, 2
        %v351 = vadd.f32 %v349, %v350
        %v352 = vrot.slane %v351, 1
        %v353 = vadd.f32 %v351, %v352
        %v354 = vmax.f32 %v340, 0.0
        %v355 = vmax.f32 %v353, 0.0
        %v356 = vmul.f32 %v354, %v275
        %v357 = vmul.f32 %v354, %v276
        %v358 = vmul.f32 %v354, %v277
        %v359 = vmul.f32 %v354, %v278
        %v360 = vmul.f32 %v355, %v275
        %v361 = vmul.f32 %v355, %v276
        %v362 = vmul.f32 %v355, %v277
        %v363 = vmul.f32 %v355, %v278
        %v364 = vsel %vm327, %v356, 0.0
        %365 = vadd.xlane.f32.xlu0 %v364
        %v366 = vpop.xlane.xlu0 %365
        %v367 = vsel %vm327, %v357, 0.0
        %368 = vadd.xlane.f32.xlu0 %v367
        %v369 = vpop.xlane.xlu0 %368
        %v370 = vsel %vm327, %v358, 0.0
        %371 = vadd.xlane.f32.xlu0 %v370
        %v372 = vpop.xlane.xlu0 %371
        %v373 = vsel %vm327, %v359, 0.0
        %374 = vadd.xlane.f32.xlu0 %v373
        %v375 = vpop.xlane.xlu0 %374
        %v376 = vsel %vm327, %v360, 0.0
        %377 = vadd.xlane.f32.xlu0 %v376
        %v378 = vpop.xlane.xlu0 %377
        %v379 = vsel %vm327, %v361, 0.0
        %380 = vadd.xlane.f32.xlu0 %v379
        %v381 = vpop.xlane.xlu0 %380
        %v382 = vsel %vm327, %v362, 0.0
        %383 = vadd.xlane.f32.xlu0 %v382
        %v384 = vpop.xlane.xlu0 %383
        %v385 = vsel %vm327, %v363, 0.0
        %386 = vadd.xlane.f32.xlu0 %v385
        %v387 = vpop.xlane.xlu0 %386
        %v388 = vadd.f32 %v366, %v378
        %v389 = vadd.f32 %v369, %v381
        %v390 = vadd.f32 %v372, %v384
        %v391 = vadd.f32 %v375, %v387
        %v392 = vxor.u32 %v388, 2147483648
        %v393 = vxor.u32 %v389, 2147483648
        %v394 = vxor.u32 %v390, 2147483648
        %v395 = vxor.u32 %v391, 2147483648
        %v396 = vmul.f32 %v392, 1.442695
        %v397 = vpow.pop %v396
        %v398 = vmul.f32 %v393, 1.442695
        %v399 = vpow.pop %v398
        %v400 = vmul.f32 %v394, 1.442695
        %v401 = vpow.pop %v400
        %v402 = vmul.f32 %v395, 1.442695
        %v403 = vpow.pop %v402
        %v404 = vadd.f32 %v397, 1.0
        %v405 = vadd.f32 %v399, 1.0
        %v406 = vadd.f32 %v401, 1.0
        %v407 = vadd.f32 %v403, 1.0
        %v408 = vrcp.pop %v404
        %v409 = vmul.f32 %v404, %v408
        %v410 = vsub.f32 1.0, %v409
        %v411 = vmul.f32 %v408, %v410
        %v412 = vadd.f32 %v408, %v411
        %vm413 = vweird.f32 %v404
        %vm414 = vweird.f32 %v408
        %vm415 = vmor %vm413, %vm414
        %v416 = vsel %vm415, %v408, %v412
        %v417 = vand.u32 2147483647, %v404
        %vm418 = vcmp.eq.f32.partialorder %v417, 8.507059e+37
        %v419 = vand.u32 %v404, 2147483648
        %v420 = vor.u32 1.1754944e-38, %v419
        %v421 = vsel %vm418, %v420, %v416
        %v422 = vmul.f32 1.0, %v421
        %v423 = vrcp.pop %v405
        %v424 = vmul.f32 %v405, %v423
        %v425 = vsub.f32 1.0, %v424
        %v426 = vmul.f32 %v423, %v425
        %v427 = vadd.f32 %v423, %v426
        %vm428 = vweird.f32 %v405
        %vm429 = vweird.f32 %v423
        %vm430 = vmor %vm428, %vm429
        %v431 = vsel %vm430, %v423, %v427
        %v432 = vand.u32 2147483647, %v405
        %vm433 = vcmp.eq.f32.partialorder %v432, 8.507059e+37
        %v434 = vand.u32 %v405, 2147483648
        %v435 = vor.u32 1.1754944e-38, %v434
        %v436 = vsel %vm433, %v435, %v431
        %v437 = vmul.f32 1.0, %v436
        %v438 = vrcp.pop %v406
        %v439 = vmul.f32 %v406, %v438
        %v440 = vsub.f32 1.0, %v439
        %v441 = vmul.f32 %v438, %v440
        %v442 = vadd.f32 %v438, %v441
        %vm443 = vweird.f32 %v406
        %vm444 = vweird.f32 %v438
        %vm445 = vmor %vm443, %vm444
        %v446 = vsel %vm445, %v438, %v442
        %v447 = vand.u32 2147483647, %v406
        %vm448 = vcmp.eq.f32.partialorder %v447, 8.507059e+37
        %v449 = vand.u32 %v406, 2147483648
        %v450 = vor.u32 1.1754944e-38, %v449
        %v451 = vsel %vm448, %v450, %v446
        %v452 = vmul.f32 1.0, %v451
        %v453 = vrcp.pop %v407
        %v454 = vmul.f32 %v407, %v453
        %v455 = vsub.f32 1.0, %v454
        %v456 = vmul.f32 %v453, %v455
        %v457 = vadd.f32 %v453, %v456
        %vm458 = vweird.f32 %v407
        %vm459 = vweird.f32 %v453
        %vm460 = vmor %vm458, %vm459
        %v461 = vsel %vm460, %v453, %v457
        %v462 = vand.u32 2147483647, %v407
        %vm463 = vcmp.eq.f32.partialorder %v462, 8.507059e+37
        %v464 = vand.u32 %v407, 2147483648
        %v465 = vor.u32 1.1754944e-38, %v464
        %v466 = vsel %vm463, %v465, %v461
        %v467 = vmul.f32 1.0, %v466
        %v468 = vmul.f32 %v235, %v422
        %v469 = vmul.f32 %v236, %v422
        %v470 = vmul.f32 %v237, %v437
        %v471 = vmul.f32 %v238, %v437
        %v472 = vmul.f32 %v239, %v452
        %v473 = vmul.f32 %v240, %v452
        %v474 = vmul.f32 %v241, %v467
        %v475 = vmul.f32 %v242, %v467
        %v476 = vadd.f32 %v468, %v470
        %v477 = vadd.f32 %v476, %v472
        %v478 = vadd.f32 %v477, %v474
        %v479 = vrot.slane %v478, 4
        %v480 = vadd.f32 %v478, %v479
        %v481 = vrot.slane %v480, 2
        %v482 = vadd.f32 %v480, %v481
        %v483 = vrot.slane %v482, 1
        %v484 = vadd.f32 %v482, %v483
        %v485 = vadd.f32 %v469, %v471
        %v486 = vadd.f32 %v485, %v473
        %v487 = vadd.f32 %v486, %v475
        %v488 = vrot.slane %v487, 4
        %v489 = vadd.f32 %v487, %v488
        %v490 = vrot.slane %v489, 2
        %v491 = vadd.f32 %v489, %v490
        %v492 = vrot.slane %v491, 1
        %v493 = vadd.f32 %v491, %v492
        %v494 = vrcp.pop 32.0
        %v495 = vmul.f32 32.0, %v494
        %v496 = vsub.f32 1.0, %v495
        %v497 = vmul.f32 %v494, %v496
        %v498 = vadd.f32 %v494, %v497
        %vm499 = vweird.f32 %v494
        %v500 = vsel %vm499, %v494, %v498
        %v501 = vmul.f32 %v484, %v500
        %v502 = vmul.f32 %v493, %v500
        %v503 = vmax.f32 %v468, %v472
        %v504 = vmax.f32 %v470, %v474
        %v505 = vmax.f32 %v503, %v504
        %v506 = vrot.slane %v505, 4
        %v507 = vmax.f32 %v505, %v506
        %v508 = vrot.slane %v507, 2
        %v509 = vmax.f32 %v507, %v508
        %v510 = vrot.slane %v509, 1
        %v511 = vmax.f32 %v509, %v510
        %v512 = vmax.f32 %v469, %v473
        %v513 = vmax.f32 %v471, %v475
        %v514 = vmax.f32 %v512, %v513
        %v515 = vrot.slane %v514, 4
        %v516 = vmax.f32 %v514, %v515
        %v517 = vrot.slane %v516, 2
        %v518 = vmax.f32 %v516, %v517
        %v519 = vrot.slane %v518, 1
        %v520 = vmax.f32 %v518, %v519
        %vm521 = vcmask 1040384
        %v522 = vsel %vm521, %v501, %v511
        %v523 = vsel %vm521, %v502, %v520
        %524 = vrot.lane.b32.xlu0 %v522, 51
        %v525 = vpop.permute.xlu0 %524
        %526 = vrot.lane.b32.xlu0 %v523, 51
        %v527 = vpop.permute.xlu0 %526
        %v528 = vlaneseq
        %v529 = vand.u32 %v528, 127
        %vm530 = vcmp.lt.s32.totalorder %v529, 51
        %v531 = vsel %vm530, %v525, %v527
        %v532 = vsel %vm530, %v527, %v525
        %v533 = vld [vmem:[#allocation2] sm:$0xf]
        %535 = vst [vmem:[#allocation1] ss:$4 sm:$0xff] %v533
        %v536 = vld.sshfl [vmem:[#allocation1] sm:$0xff pattern:$0x73625140]
        %v537 = vld.sshfl [vmem:[#allocation1 + $0x8] sm:$0xff pattern:$0x73625140]
        %v540 = vmul.f32 %v532, %v536
        %v541 = vmul.f32 %v531, %v537
        %v542 = vadd.f32 %v540, 0.0
        %v543 = vadd.f32 %v541, 0.0
        %544 = vrot.lane.b32.xlu0 %v522, 50
        %v545 = vpop.permute.xlu0 %544
        %546 = vrot.lane.b32.xlu0 %v523, 50
        %v547 = vpop.permute.xlu0 %546
        %vm548 = vcmp.lt.s32.totalorder %v529, 50
        %v549 = vsel %vm548, %v545, %v547
        %v550 = vsel %vm548, %v547, %v545
        %s551 = scalar_lea.vmem [#allocation2], 4
        %v552 = vld [vmem:[%s551] sm:$0xf]
        %554 = vst [vmem:[#allocation1] ss:$4 sm:$0xff] %v552
        %v555 = vld.sshfl [vmem:[#allocation1] sm:$0xff pattern:$0x73625140]
        %v556 = vld.sshfl [vmem:[#allocation1 + $0x8] sm:$0xff pattern:$0x73625140]
        %v559 = vmul.f32 %v550, %v555
        %v560 = vmul.f32 %v549, %v556
        %v561 = vadd.f32 %v559, 0.0
        %v562 = vadd.f32 %v560, 0.0
        %563 = vrot.lane.b32.xlu0 %v522, 49
        %v564 = vpop.permute.xlu0 %563
        %565 = vrot.lane.b32.xlu0 %v523, 49
        %v566 = vpop.permute.xlu0 %565
        %vm567 = vcmp.lt.s32.totalorder %v529, 49
        %v568 = vsel %vm567, %v564, %v566
        %v569 = vsel %vm567, %v566, %v564
        %s570 = scalar_lea.vmem [#allocation2], 8
        %v571 = vld [vmem:[%s570] sm:$0xf]
        %573 = vst [vmem:[#allocation1] ss:$4 sm:$0xff] %v571
        %v574 = vld.sshfl [vmem:[#allocation1] sm:$0xff pattern:$0x73625140]
        %v575 = vld.sshfl [vmem:[#allocation1 + $0x8] sm:$0xff pattern:$0x73625140]
        %v578 = vmul.f32 %v569, %v574
        %v579 = vmul.f32 %v568, %v575
        %v580 = vadd.f32 %v578, 0.0
        %v581 = vadd.f32 %v579, 0.0
        %582 = vrot.lane.b32.xlu0 %v522, 48
        %v583 = vpop.permute.xlu0 %582
        %584 = vrot.lane.b32.xlu0 %v523, 48
        %v585 = vpop.permute.xlu0 %584
        %vm586 = vcmp.lt.s32.totalorder %v529, 48
        %v587 = vsel %vm586, %v583, %v585
        %v588 = vsel %vm586, %v585, %v583
        %s589 = scalar_lea.vmem [#allocation2], 12
        %v590 = vld [vmem:[%s589] sm:$0xf]
        %592 = vst [vmem:[#allocation1] ss:$4 sm:$0xff] %v590
        %v593 = vld.sshfl [vmem:[#allocation1] sm:$0xff pattern:$0x73625140]
        %v594 = vld.sshfl [vmem:[#allocation1 + $0x8] sm:$0xff pattern:$0x73625140]
        %v597 = vmul.f32 %v588, %v593
        %v598 = vmul.f32 %v587, %v594
        %v599 = vadd.f32 %v597, 0.0
        %v600 = vadd.f32 %v598, 0.0
        %601 = vrot.lane.b32.xlu0 %v522, 47
        %v602 = vpop.permute.xlu0 %601
        %603 = vrot.lane.b32.xlu0 %v523, 47
        %v604 = vpop.permute.xlu0 %603
        %vm605 = vcmp.lt.s32.totalorder %v529, 47
        %v606 = vsel %vm605, %v602, %v604
        %v607 = vsel %vm605, %v604, %v602
        %s608 = scalar_lea.vmem [#allocation2], 16
        %v609 = vld [vmem:[%s608] sm:$0xf]
        %611 = vst [vmem:[#allocation1] ss:$4 sm:$0xff] %v609
        %v612 = vld.sshfl [vmem:[#allocation1] sm:$0xff pattern:$0x73625140]
        %v613 = vld.sshfl [vmem:[#allocation1 + $0x8] sm:$0xff pattern:$0x73625140]
        %v616 = vmul.f32 %v607, %v612
        %v617 = vmul.f32 %v606, %v613
        %v618 = vadd.f32 %v542, %v616
        %v619 = vadd.f32 %v543, %v617
        %620 = vrot.lane.b32.xlu0 %v522, 46
        %v621 = vpop.permute.xlu0 %620
        %622 = vrot.lane.b32.xlu0 %v523, 46
        %v623 = vpop.permute.xlu0 %622
        %vm624 = vcmp.lt.s32.totalorder %v529, 46
        %v625 = vsel %vm624, %v621, %v623
        %v626 = vsel %vm624, %v623, %v621
        %s627 = scalar_lea.vmem [#allocation2], 20
        %v628 = vld [vmem:[%s627] sm:$0xf]
        %630 = vst [vmem:[#allocation1] ss:$4 sm:$0xff] %v628
        %v631 = vld.sshfl [vmem:[#allocation1] sm:$0xff pattern:$0x73625140]
        %v632 = vld.sshfl [vmem:[#allocation1 + $0x8] sm:$0xff pattern:$0x73625140]
        %v635 = vmul.f32 %v626, %v631
        %v636 = vmul.f32 %v625, %v632
        %v637 = vadd.f32 %v561, %v635
        %v638 = vadd.f32 %v562, %v636
        %639 = vrot.lane.b32.xlu0 %v522, 45
        %v640 = vpop.permute.xlu0 %639
        %641 = vrot.lane.b32.xlu0 %v523, 45
        %v642 = vpop.permute.xlu0 %641
        %vm643 = vcmp.lt.s32.totalorder %v529, 45
        %v644 = vsel %vm643, %v640, %v642
        %v645 = vsel %vm643, %v642, %v640
        %s646 = scalar_lea.vmem [#allocation2], 24
        %v647 = vld [vmem:[%s646] sm:$0xf]
        %649 = vst [vmem:[#allocation1] ss:$4 sm:$0xff] %v647
        %v650 = vld.sshfl [vmem:[#allocation1] sm:$0xff pattern:$0x73625140]
        %v651 = vld.sshfl [vmem:[#allocation1 + $0x8] sm:$0xff pattern:$0x73625140]
        %v654 = vmul.f32 %v645, %v650
        %v655 = vmul.f32 %v644, %v651
        %v656 = vadd.f32 %v580, %v654
        %v657 = vadd.f32 %v581, %v655
        %658 = vrot.lane.b32.xlu0 %v522, 35
        %v659 = vpop.permute.xlu0 %658
        %660 = vrot.lane.b32.xlu0 %v523, 35
        %v661 = vpop.permute.xlu0 %660
        %vm662 = vcmp.lt.s32.totalorder %v529, 35
        %v663 = vsel %vm662, %v659, %v661
        %v664 = vsel %vm662, %v661, %v659
        %s665 = scalar_lea.vmem [#allocation2], 28
        %v666 = vld [vmem:[%s665] sm:$0xf]
        %668 = vst [vmem:[#allocation1] ss:$4 sm:$0xff] %v666
        %v669 = vld.sshfl [vmem:[#allocation1] sm:$0xff pattern:$0x73625140]
        %v670 = vld.sshfl [vmem:[#allocation1 + $0x8] sm:$0xff pattern:$0x73625140]
        %v673 = vmul.f32 %v664, %v669
        %v674 = vmul.f32 %v663, %v670
        %v675 = vadd.f32 %v599, %v673
        %v676 = vadd.f32 %v600, %v674
        %677 = vrot.lane.b32.xlu0 %v522, 34
        %v678 = vpop.permute.xlu0 %677
        %679 = vrot.lane.b32.xlu0 %v523, 34
        %v680 = vpop.permute.xlu0 %679
        %vm681 = vcmp.lt.s32.totalorder %v529, 34
        %v682 = vsel %vm681, %v678, %v680
        %v683 = vsel %vm681, %v680, %v678
        %s684 = scalar_lea.vmem [#allocation2], 32
        %v685 = vld [vmem:[%s684] sm:$0xf]
        %687 = vst [vmem:[#allocation1] ss:$4 sm:$0xff] %v685
        %v688 = vld.sshfl [vmem:[#allocation1] sm:$0xff pattern:$0x73625140]
        %v689 = vld.sshfl [vmem:[#allocation1 + $0x8] sm:$0xff pattern:$0x73625140]
        %v692 = vmul.f32 %v683, %v688
        %v693 = vmul.f32 %v682, %v689
        %v694 = vadd.f32 %v618, %v692
        %v695 = vadd.f32 %v619, %v693
        %696 = vrot.lane.b32.xlu0 %v522, 33
        %v697 = vpop.permute.xlu0 %696
        %698 = vrot.lane.b32.xlu0 %v523, 33
        %v699 = vpop.permute.xlu0 %698
        %vm700 = vcmp.lt.s32.totalorder %v529, 33
        %v701 = vsel %vm700, %v697, %v699
        %v702 = vsel %vm700, %v699, %v697
        %s703 = scalar_lea.vmem [#allocation2], 36
        %v704 = vld [vmem:[%s703] sm:$0xf]
        %706 = vst [vmem:[#allocation1] ss:$4 sm:$0xff] %v704
        %v707 = vld.sshfl [vmem:[#allocation1] sm:$0xff pattern:$0x73625140]
        %v708 = vld.sshfl [vmem:[#allocation1 + $0x8] sm:$0xff pattern:$0x73625140]
        %v711 = vmul.f32 %v702, %v707
        %v712 = vmul.f32 %v701, %v708
        %v713 = vadd.f32 %v637, %v711
        %v714 = vadd.f32 %v638, %v712
        %715 = vrot.lane.b32.xlu0 %v522, 32
        %v716 = vpop.permute.xlu0 %715
        %717 = vrot.lane.b32.xlu0 %v523, 32
        %v718 = vpop.permute.xlu0 %717
        %vm719 = vcmp.lt.s32.totalorder %v529, 32
        %v720 = vsel %vm719, %v716, %v718
        %v721 = vsel %vm719, %v718, %v716
        %s722 = scalar_lea.vmem [#allocation2], 40
        %v723 = vld [vmem:[%s722] sm:$0xf]
        %725 = vst [vmem:[#allocation1] ss:$4 sm:$0xff] %v723
        %v726 = vld.sshfl [vmem:[#allocation1] sm:$0xff pattern:$0x73625140]
        %v727 = vld.sshfl [vmem:[#allocation1 + $0x8] sm:$0xff pattern:$0x73625140]
        %v730 = vmul.f32 %v721, %v726
        %v731 = vmul.f32 %v720, %v727
        %v732 = vadd.f32 %v656, %v730
        %v733 = vadd.f32 %v657, %v731
        %734 = vrot.lane.b32.xlu0 %v522, 31
        %v735 = vpop.permute.xlu0 %734
        %736 = vrot.lane.b32.xlu0 %v523, 31
        %v737 = vpop.permute.xlu0 %736
        %vm738 = vcmp.lt.s32.totalorder %v529, 31
        %v739 = vsel %vm738, %v735, %v737
        %v740 = vsel %vm738, %v737, %v735
        %s741 = scalar_lea.vmem [#allocation2], 44
        %v742 = vld [vmem:[%s741] sm:$0xf]
        %744 = vst [vmem:[#allocation1] ss:$4 sm:$0xff] %v742
        %v745 = vld.sshfl [vmem:[#allocation1] sm:$0xff pattern:$0x73625140]
        %v746 = vld.sshfl [vmem:[#allocation1 + $0x8] sm:$0xff pattern:$0x73625140]
        %v749 = vmul.f32 %v740, %v745
        %v750 = vmul.f32 %v739, %v746
        %v751 = vadd.f32 %v675, %v749
        %v752 = vadd.f32 %v676, %v750
        %753 = vrot.lane.b32.xlu0 %v522, 30
        %v754 = vpop.permute.xlu0 %753
        %755 = vrot.lane.b32.xlu0 %v523, 30
        %v756 = vpop.permute.xlu0 %755
        %vm757 = vcmp.lt.s32.totalorder %v529, 30
        %v758 = vsel %vm757, %v754, %v756
        %v759 = vsel %vm757, %v756, %v754
        %s760 = scalar_lea.vmem [#allocation2], 48
        %v761 = vld [vmem:[%s760] sm:$0xf]
        %763 = vst [vmem:[#allocation1] ss:$4 sm:$0xff] %v761
        %v764 = vld.sshfl [vmem:[#allocation1] sm:$0xff pattern:$0x73625140]
        %v765 = vld.sshfl [vmem:[#allocation1 + $0x8] sm:$0xff pattern:$0x73625140]
        %v768 = vmul.f32 %v759, %v764
        %v769 = vmul.f32 %v758, %v765
        %v770 = vadd.f32 %v694, %v768
        %v771 = vadd.f32 %v695, %v769
        %772 = vrot.lane.b32.xlu0 %v522, 29
        %v773 = vpop.permute.xlu0 %772
        %774 = vrot.lane.b32.xlu0 %v523, 29
        %v775 = vpop.permute.xlu0 %774
        %vm776 = vcmp.lt.s32.totalorder %v529, 29
        %v777 = vsel %vm776, %v773, %v775
        %v778 = vsel %vm776, %v775, %v773
        %s779 = scalar_lea.vmem [#allocation2], 52
        %v780 = vld [vmem:[%s779] sm:$0xf]
        %782 = vst [vmem:[#allocation1] ss:$4 sm:$0xff] %v780
        %v783 = vld.sshfl [vmem:[#allocation1] sm:$0xff pattern:$0x73625140]
        %v784 = vld.sshfl [vmem:[#allocation1 + $0x8] sm:$0xff pattern:$0x73625140]
        %v787 = vmul.f32 %v778, %v783
        %v788 = vmul.f32 %v777, %v784
        %v789 = vadd.f32 %v713, %v787
        %v790 = vadd.f32 %v714, %v788
        %791 = vrot.lane.b32.xlu0 %v522, 19
        %v792 = vpop.permute.xlu0 %791
        %793 = vrot.lane.b32.xlu0 %v523, 19
        %v794 = vpop.permute.xlu0 %793
        %vm795 = vcmp.lt.s32.totalorder %v529, 19
        %v796 = vsel %vm795, %v792, %v794
        %v797 = vsel %vm795, %v794, %v792
        %s798 = scalar_lea.vmem [#allocation2], 56
        %v799 = vld [vmem:[%s798] sm:$0xf]
        %801 = vst [vmem:[#allocation1] ss:$4 sm:$0xff] %v799
        %v802 = vld.sshfl [vmem:[#allocation1] sm:$0xff pattern:$0x73625140]
        %v803 = vld.sshfl [vmem:[#allocation1 + $0x8] sm:$0xff pattern:$0x73625140]
        %v806 = vmul.f32 %v797, %v802
        %v807 = vmul.f32 %v796, %v803
        %v808 = vadd.f32 %v732, %v806
        %v809 = vadd.f32 %v733, %v807
        %810 = vrot.lane.b32.xlu0 %v522, 18
        %v811 = vpop.permute.xlu0 %810
        %812 = vrot.lane.b32.xlu0 %v523, 18
        %v813 = vpop.permute.xlu0 %812
        %vm814 = vcmp.lt.s32.totalorder %v529, 18
        %v815 = vsel %vm814, %v811, %v813
        %v816 = vsel %vm814, %v813, %v811
        %s817 = scalar_lea.vmem [#allocation2], 60
        %v818 = vld [vmem:[%s817] sm:$0xf]
        %820 = vst [vmem:[#allocation1] ss:$4 sm:$0xff] %v818
        %v821 = vld.sshfl [vmem:[#allocation1] sm:$0xff pattern:$0x73625140]
        %v822 = vld.sshfl [vmem:[#allocation1 + $0x8] sm:$0xff pattern:$0x73625140]
        %v825 = vmul.f32 %v816, %v821
        %v826 = vmul.f32 %v815, %v822
        %v827 = vadd.f32 %v751, %v825
        %v828 = vadd.f32 %v752, %v826
        %829 = vrot.lane.b32.xlu0 %v522, 17
        %v830 = vpop.permute.xlu0 %829
        %831 = vrot.lane.b32.xlu0 %v523, 17
        %v832 = vpop.permute.xlu0 %831
        %vm833 = vcmp.lt.s32.totalorder %v529, 17
        %v834 = vsel %vm833, %v830, %v832
        %v835 = vsel %vm833, %v832, %v830
        %s836 = scalar_lea.vmem [#allocation2], 64
        %v837 = vld [vmem:[%s836] sm:$0xf]
        %839 = vst [vmem:[#allocation1] ss:$4 sm:$0xff] %v837
        %v840 = vld.sshfl [vmem:[#allocation1] sm:$0xff pattern:$0x73625140]
        %v841 = vld.sshfl [vmem:[#allocation1 + $0x8] sm:$0xff pattern:$0x73625140]
        %v844 = vmul.f32 %v835, %v840
        %v845 = vmul.f32 %v834, %v841
        %v846 = vadd.f32 %v770, %v844
        %v847 = vadd.f32 %v771, %v845
        %848 = vrot.lane.b32.xlu0 %v522, 16
        %v849 = vpop.permute.xlu0 %848
        %850 = vrot.lane.b32.xlu0 %v523, 16
        %v851 = vpop.permute.xlu0 %850
        %vm852 = vcmp.lt.s32.totalorder %v529, 16
        %v853 = vsel %vm852, %v849, %v851
        %v854 = vsel %vm852, %v851, %v849
        %s855 = scalar_lea.vmem [#allocation2], 68
        %v856 = vld [vmem:[%s855] sm:$0xf]
        %858 = vst [vmem:[#allocation1] ss:$4 sm:$0xff] %v856
        %v859 = vld.sshfl [vmem:[#allocation1] sm:$0xff pattern:$0x73625140]
        %v860 = vld.sshfl [vmem:[#allocation1 + $0x8] sm:$0xff pattern:$0x73625140]
        %v863 = vmul.f32 %v854, %v859
        %v864 = vmul.f32 %v853, %v860
        %v865 = vadd.f32 %v789, %v863
        %v866 = vadd.f32 %v790, %v864
        %867 = vrot.lane.b32.xlu0 %v522, 15
        %v868 = vpop.permute.xlu0 %867
        %869 = vrot.lane.b32.xlu0 %v523, 15
        %v870 = vpop.permute.xlu0 %869
        %vm871 = vcmp.lt.s32.totalorder %v529, 15
        %v872 = vsel %vm871, %v868, %v870
        %v873 = vsel %vm871, %v870, %v868
        %s874 = scalar_lea.vmem [#allocation2], 72
        %v875 = vld [vmem:[%s874] sm:$0xf]
        %877 = vst [vmem:[#allocation1] ss:$4 sm:$0xff] %v875
        %v878 = vld.sshfl [vmem:[#allocation1] sm:$0xff pattern:$0x73625140]
        %v879 = vld.sshfl [vmem:[#allocation1 + $0x8] sm:$0xff pattern:$0x73625140]
        %v882 = vmul.f32 %v873, %v878
        %v883 = vmul.f32 %v872, %v879
        %v884 = vadd.f32 %v808, %v882
        %v885 = vadd.f32 %v809, %v883
        %886 = vrot.lane.b32.xlu0 %v522, 14
        %v887 = vpop.permute.xlu0 %886
        %888 = vrot.lane.b32.xlu0 %v523, 14
        %v889 = vpop.permute.xlu0 %888
        %vm890 = vcmp.lt.s32.totalorder %v529, 14
        %v891 = vsel %vm890, %v887, %v889
        %v892 = vsel %vm890, %v889, %v887
        %s893 = scalar_lea.vmem [#allocation2], 76
        %v894 = vld [vmem:[%s893] sm:$0xf]
        %896 = vst [vmem:[#allocation1] ss:$4 sm:$0xff] %v894
        %v897 = vld.sshfl [vmem:[#allocation1] sm:$0xff pattern:$0x73625140]
        %v898 = vld.sshfl [vmem:[#allocation1 + $0x8] sm:$0xff pattern:$0x73625140]
        %v901 = vmul.f32 %v892, %v897
        %v902 = vmul.f32 %v891, %v898
        %v903 = vadd.f32 %v827, %v901
        %v904 = vadd.f32 %v828, %v902
        %905 = vrot.lane.b32.xlu0 %v522, 13
        %v906 = vpop.permute.xlu0 %905
        %907 = vrot.lane.b32.xlu0 %v523, 13
        %v908 = vpop.permute.xlu0 %907
        %vm909 = vcmp.lt.s32.totalorder %v529, 13
        %v910 = vsel %vm909, %v906, %v908
        %v911 = vsel %vm909, %v908, %v906
        %s912 = scalar_lea.vmem [#allocation2], 80
        %v913 = vld [vmem:[%s912] sm:$0xf]
        %915 = vst [vmem:[#allocation1] ss:$4 sm:$0xff] %v913
        %v916 = vld.sshfl [vmem:[#allocation1] sm:$0xff pattern:$0x73625140]
        %v917 = vld.sshfl [vmem:[#allocation1 + $0x8] sm:$0xff pattern:$0x73625140]
        %v920 = vmul.f32 %v911, %v916
        %v921 = vmul.f32 %v910, %v917
        %v922 = vadd.f32 %v846, %v920
        %v923 = vadd.f32 %v847, %v921
        %924 = vrot.lane.b32.xlu0 %v522, 3
        %v925 = vpop.permute.xlu0 %924
        %926 = vrot.lane.b32.xlu0 %v523, 3
        %v927 = vpop.permute.xlu0 %926
        %vm928 = vcmp.lt.s32.totalorder %v529, 3
        %v929 = vsel %vm928, %v925, %v927
        %v930 = vsel %vm928, %v927, %v925
        %s931 = scalar_lea.vmem [#allocation2], 84
        %v932 = vld [vmem:[%s931] sm:$0xf]
        %934 = vst [vmem:[#allocation1] ss:$4 sm:$0xff] %v932
        %v935 = vld.sshfl [vmem:[#allocation1] sm:$0xff pattern:$0x73625140]
        %v936 = vld.sshfl [vmem:[#allocation1 + $0x8] sm:$0xff pattern:$0x73625140]
        %v939 = vmul.f32 %v930, %v935
        %v940 = vmul.f32 %v929, %v936
        %v941 = vadd.f32 %v865, %v939
        %v942 = vadd.f32 %v866, %v940
        %943 = vrot.lane.b32.xlu0 %v522, 2
        %v944 = vpop.permute.xlu0 %943
        %945 = vrot.lane.b32.xlu0 %v523, 2
        %v946 = vpop.permute.xlu0 %945
        %vm947 = vcmp.lt.s32.totalorder %v529, 2
        %v948 = vsel %vm947, %v944, %v946
        %v949 = vsel %vm947, %v946, %v944
        %s950 = scalar_lea.vmem [#allocation2], 88
        %v951 = vld [vmem:[%s950] sm:$0xf]
        %953 = vst [vmem:[#allocation1] ss:$4 sm:$0xff] %v951
        %v954 = vld.sshfl [vmem:[#allocation1] sm:$0xff pattern:$0x73625140]
        %v955 = vld.sshfl [vmem:[#allocation1 + $0x8] sm:$0xff pattern:$0x73625140]
        %v958 = vmul.f32 %v949, %v954
        %v959 = vmul.f32 %v948, %v955
        %v960 = vadd.f32 %v884, %v958
        %v961 = vadd.f32 %v885, %v959
        %962 = vrot.lane.b32.xlu0 %v522, 1
        %v963 = vpop.permute.xlu0 %962
        %964 = vrot.lane.b32.xlu0 %v523, 1
        %v965 = vpop.permute.xlu0 %964
        %vm966 = vcmp.lt.s32.totalorder %v529, 1
        %v967 = vsel %vm966, %v963, %v965
        %v968 = vsel %vm966, %v965, %v963
        %s969 = scalar_lea.vmem [#allocation2], 92
        %v970 = vld [vmem:[%s969] sm:$0xf]
        %972 = vst [vmem:[#allocation1] ss:$4 sm:$0xff] %v970
        %v973 = vld.sshfl [vmem:[#allocation1] sm:$0xff pattern:$0x73625140]
        %v974 = vld.sshfl [vmem:[#allocation1 + $0x8] sm:$0xff pattern:$0x73625140]
        %v977 = vmul.f32 %v968, %v973
        %v978 = vmul.f32 %v967, %v974
        %v979 = vadd.f32 %v903, %v977
        %v980 = vadd.f32 %v904, %v978
        %s981 = scalar_lea.vmem [#allocation2], 96
        %v982 = vld [vmem:[%s981] sm:$0xf]
        %984 = vst [vmem:[#allocation1] ss:$4 sm:$0xff] %v982
        %v985 = vld.sshfl [vmem:[#allocation1] sm:$0xff pattern:$0x73625140]
        %v986 = vld.sshfl [vmem:[#allocation1 + $0x8] sm:$0xff pattern:$0x73625140]
        %v989 = vmul.f32 %v522, %v985
        %v990 = vmul.f32 %v523, %v986
        %v991 = vadd.f32 %v922, %v989
        %v992 = vadd.f32 %v923, %v990
        %993 = vrot.lane.b32.xlu0 %v522, 127
        %v994 = vpop.permute.xlu0 %993
        %995 = vrot.lane.b32.xlu0 %v523, 127
        %v996 = vpop.permute.xlu0 %995
        %vm997 = vcmp.lt.s32.totalorder %v529, 127
        %v998 = vsel %vm997, %v994, %v996
        %v999 = vsel %vm997, %v996, %v994
        %s1000 = scalar_lea.vmem [#allocation2], 100
        %v1001 = vld [vmem:[%s1000] sm:$0xf]
        %1003 = vst [vmem:[#allocation1] ss:$4 sm:$0xff] %v1001
        %v1004 = vld.sshfl [vmem:[#allocation1] sm:$0xff pattern:$0x73625140]
        %v1005 = vld.sshfl [vmem:[#allocation1 + $0x8] sm:$0xff pattern:$0x73625140]
        %v1008 = vmul.f32 %v998, %v1004
        %v1009 = vmul.f32 %v999, %v1005
        %v1010 = vadd.f32 %v941, %v1008
        %v1011 = vadd.f32 %v942, %v1009
        %1012 = vrot.lane.b32.xlu0 %v522, 126
        %v1013 = vpop.permute.xlu0 %1012
        %1014 = vrot.lane.b32.xlu0 %v523, 126
        %v1015 = vpop.permute.xlu0 %1014
        %vm1016 = vcmp.lt.s32.totalorder %v529, 126
        %v1017 = vsel %vm1016, %v1013, %v1015
        %v1018 = vsel %vm1016, %v1015, %v1013
        %s1019 = scalar_lea.vmem [#allocation2], 104
        %v1020 = vld [vmem:[%s1019] sm:$0xf]
        %1022 = vst [vmem:[#allocation1] ss:$4 sm:$0xff] %v1020
        %v1023 = vld.sshfl [vmem:[#allocation1] sm:$0xff pattern:$0x73625140]
        %v1024 = vld.sshfl [vmem:[#allocation1 + $0x8] sm:$0xff pattern:$0x73625140]
        %v1027 = vmul.f32 %v1017, %v1023
        %v1028 = vmul.f32 %v1018, %v1024
        %v1029 = vadd.f32 %v960, %v1027
        %v1030 = vadd.f32 %v961, %v1028
        %1031 = vrot.lane.b32.xlu0 %v522, 125
        %v1032 = vpop.permute.xlu0 %1031
        %1033 = vrot.lane.b32.xlu0 %v523, 125
        %v1034 = vpop.permute.xlu0 %1033
        %vm1035 = vcmp.lt.s32.totalorder %v529, 125
        %v1036 = vsel %vm1035, %v1032, %v1034
        %v1037 = vsel %vm1035, %v1034, %v1032
        %s1038 = scalar_lea.vmem [#allocation2], 108
        %v1039 = vld [vmem:[%s1038] sm:$0xf]
        %1041 = vst [vmem:[#allocation1] ss:$4 sm:$0xff] %v1039
        %v1042 = vld.sshfl [vmem:[#allocation1] sm:$0xff pattern:$0x73625140]
        %v1043 = vld.sshfl [vmem:[#allocation1 + $0x8] sm:$0xff pattern:$0x73625140]
        %v1046 = vmul.f32 %v1036, %v1042
        %v1047 = vmul.f32 %v1037, %v1043
        %v1048 = vadd.f32 %v979, %v1046
        %v1049 = vadd.f32 %v980, %v1047
        %1050 = vrot.lane.b32.xlu0 %v522, 115
        %v1051 = vpop.permute.xlu0 %1050
        %1052 = vrot.lane.b32.xlu0 %v523, 115
        %v1053 = vpop.permute.xlu0 %1052
        %vm1054 = vcmp.lt.s32.totalorder %v529, 115
        %v1055 = vsel %vm1054, %v1051, %v1053
        %v1056 = vsel %vm1054, %v1053, %v1051
        %s1057 = scalar_lea.vmem [#allocation2], 112
        %v1058 = vld [vmem:[%s1057] sm:$0xf]
        %1060 = vst [vmem:[#allocation1] ss:$4 sm:$0xff] %v1058
        %v1061 = vld.sshfl [vmem:[#allocation1] sm:$0xff pattern:$0x73625140]
        %v1062 = vld.sshfl [vmem:[#allocation1 + $0x8] sm:$0xff pattern:$0x73625140]
        %v1065 = vmul.f32 %v1055, %v1061
        %v1066 = vmul.f32 %v1056, %v1062
        %v1067 = vadd.f32 %v991, %v1065
        %v1068 = vadd.f32 %v992, %v1066
        %1069 = vrot.lane.b32.xlu0 %v522, 114
        %v1070 = vpop.permute.xlu0 %1069
        %1071 = vrot.lane.b32.xlu0 %v523, 114
        %v1072 = vpop.permute.xlu0 %1071
        %vm1073 = vcmp.lt.s32.totalorder %v529, 114
        %v1074 = vsel %vm1073, %v1070, %v1072
        %v1075 = vsel %vm1073, %v1072, %v1070
        %s1076 = scalar_lea.vmem [#allocation2], 116
        %v1077 = vld [vmem:[%s1076] sm:$0xf]
        %1079 = vst [vmem:[#allocation1] ss:$4 sm:$0xff] %v1077
        %v1080 = vld.sshfl [vmem:[#allocation1] sm:$0xff pattern:$0x73625140]
        %v1081 = vld.sshfl [vmem:[#allocation1 + $0x8] sm:$0xff pattern:$0x73625140]
        %v1084 = vmul.f32 %v1074, %v1080
        %v1085 = vmul.f32 %v1075, %v1081
        %v1086 = vadd.f32 %v1010, %v1084
        %v1087 = vadd.f32 %v1011, %v1085
        %1088 = vrot.lane.b32.xlu0 %v522, 113
        %v1089 = vpop.permute.xlu0 %1088
        %1090 = vrot.lane.b32.xlu0 %v523, 113
        %v1091 = vpop.permute.xlu0 %1090
        %vm1092 = vcmp.lt.s32.totalorder %v529, 113
        %v1093 = vsel %vm1092, %v1089, %v1091
        %v1094 = vsel %vm1092, %v1091, %v1089
        %s1095 = scalar_lea.vmem [#allocation2], 120
        %v1096 = vld [vmem:[%s1095] sm:$0xf]
        %1098 = vst [vmem:[#allocation1] ss:$4 sm:$0xff] %v1096
        %v1099 = vld.sshfl [vmem:[#allocation1] sm:$0xff pattern:$0x73625140]
        %v1100 = vld.sshfl [vmem:[#allocation1 + $0x8] sm:$0xff pattern:$0x73625140]
        %v1103 = vmul.f32 %v1093, %v1099
        %v1104 = vmul.f32 %v1094, %v1100
        %v1105 = vadd.f32 %v1029, %v1103
        %v1106 = vadd.f32 %v1030, %v1104
        %1107 = vrot.lane.b32.xlu0 %v522, 112
        %v1108 = vpop.permute.xlu0 %1107
        %1109 = vrot.lane.b32.xlu0 %v523, 112
        %v1110 = vpop.permute.xlu0 %1109
        %vm1111 = vcmp.lt.s32.totalorder %v529, 112
        %v1112 = vsel %vm1111, %v1108, %v1110
        %v1113 = vsel %vm1111, %v1110, %v1108
        %s1114 = scalar_lea.vmem [#allocation2], 124
        %v1115 = vld [vmem:[%s1114] sm:$0xf]
        %1117 = vst [vmem:[#allocation1] ss:$4 sm:$0xff] %v1115
        %v1118 = vld.sshfl [vmem:[#allocation1] sm:$0xff pattern:$0x73625140]
        %v1119 = vld.sshfl [vmem:[#allocation1 + $0x8] sm:$0xff pattern:$0x73625140]
        %v1122 = vmul.f32 %v1112, %v1118
        %v1123 = vmul.f32 %v1113, %v1119
        %v1124 = vadd.f32 %v1048, %v1122
        %v1125 = vadd.f32 %v1049, %v1123
        %1126 = vrot.lane.b32.xlu0 %v522, 111
        %v1127 = vpop.permute.xlu0 %1126
        %1128 = vrot.lane.b32.xlu0 %v523, 111
        %v1129 = vpop.permute.xlu0 %1128
        %vm1130 = vcmp.lt.s32.totalorder %v529, 111
        %v1131 = vsel %vm1130, %v1127, %v1129
        %v1132 = vsel %vm1130, %v1129, %v1127
        %s1133 = scalar_lea.vmem [#allocation2], 128
        %v1134 = vld [vmem:[%s1133] sm:$0xf]
        %1136 = vst [vmem:[#allocation1] ss:$4 sm:$0xff] %v1134
        %v1137 = vld.sshfl [vmem:[#allocation1] sm:$0xff pattern:$0x73625140]
        %v1138 = vld.sshfl [vmem:[#allocation1 + $0x8] sm:$0xff pattern:$0x73625140]
        %v1141 = vmul.f32 %v1131, %v1137
        %v1142 = vmul.f32 %v1132, %v1138
        %v1143 = vadd.f32 %v1067, %v1141
        %v1144 = vadd.f32 %v1068, %v1142
        %1145 = vrot.lane.b32.xlu0 %v522, 110
        %v1146 = vpop.permute.xlu0 %1145
        %1147 = vrot.lane.b32.xlu0 %v523, 110
        %v1148 = vpop.permute.xlu0 %1147
        %vm1149 = vcmp.lt.s32.totalorder %v529, 110
        %v1150 = vsel %vm1149, %v1146, %v1148
        %v1151 = vsel %vm1149, %v1148, %v1146
        %s1152 = scalar_lea.vmem [#allocation2], 132
        %v1153 = vld [vmem:[%s1152] sm:$0xf]
        %1155 = vst [vmem:[#allocation1] ss:$4 sm:$0xff] %v1153
        %v1156 = vld.sshfl [vmem:[#allocation1] sm:$0xff pattern:$0x73625140]
        %v1157 = vld.sshfl [vmem:[#allocation1 + $0x8] sm:$0xff pattern:$0x73625140]
        %v1160 = vmul.f32 %v1150, %v1156
        %v1161 = vmul.f32 %v1151, %v1157
        %v1162 = vadd.f32 %v1086, %v1160
        %v1163 = vadd.f32 %v1087, %v1161
        %1164 = vrot.lane.b32.xlu0 %v522, 109
        %v1165 = vpop.permute.xlu0 %1164
        %1166 = vrot.lane.b32.xlu0 %v523, 109
        %v1167 = vpop.permute.xlu0 %1166
        %vm1168 = vcmp.lt.s32.totalorder %v529, 109
        %v1169 = vsel %vm1168, %v1165, %v1167
        %v1170 = vsel %vm1168, %v1167, %v1165
        %s1171 = scalar_lea.vmem [#allocation2], 136
        %v1172 = vld [vmem:[%s1171] sm:$0xf]
        %1174 = vst [vmem:[#allocation1] ss:$4 sm:$0xff] %v1172
        %v1175 = vld.sshfl [vmem:[#allocation1] sm:$0xff pattern:$0x73625140]
        %v1176 = vld.sshfl [vmem:[#allocation1 + $0x8] sm:$0xff pattern:$0x73625140]
        %v1179 = vmul.f32 %v1169, %v1175
        %v1180 = vmul.f32 %v1170, %v1176
        %v1181 = vadd.f32 %v1105, %v1179
        %v1182 = vadd.f32 %v1106, %v1180
        %1183 = vrot.lane.b32.xlu0 %v522, 99
        %v1184 = vpop.permute.xlu0 %1183
        %1185 = vrot.lane.b32.xlu0 %v523, 99
        %v1186 = vpop.permute.xlu0 %1185
        %vm1187 = vcmp.lt.s32.totalorder %v529, 99
        %v1188 = vsel %vm1187, %v1184, %v1186
        %v1189 = vsel %vm1187, %v1186, %v1184
        %s1190 = scalar_lea.vmem [#allocation2], 140
        %v1191 = vld [vmem:[%s1190] sm:$0xf]
        %1193 = vst [vmem:[#allocation1] ss:$4 sm:$0xff] %v1191
        %v1194 = vld.sshfl [vmem:[#allocation1] sm:$0xff pattern:$0x73625140]
        %v1195 = vld.sshfl [vmem:[#allocation1 + $0x8] sm:$0xff pattern:$0x73625140]
        %v1198 = vmul.f32 %v1188, %v1194
        %v1199 = vmul.f32 %v1189, %v1195
        %v1200 = vadd.f32 %v1124, %v1198
        %v1201 = vadd.f32 %v1125, %v1199
        %1202 = vrot.lane.b32.xlu0 %v522, 98
        %v1203 = vpop.permute.xlu0 %1202
        %1204 = vrot.lane.b32.xlu0 %v523, 98
        %v1205 = vpop.permute.xlu0 %1204
        %vm1206 = vcmp.lt.s32.totalorder %v529, 98
        %v1207 = vsel %vm1206, %v1203, %v1205
        %v1208 = vsel %vm1206, %v1205, %v1203
        %s1209 = scalar_lea.vmem [#allocation2], 144
        %v1210 = vld [vmem:[%s1209] sm:$0xf]
        %1212 = vst [vmem:[#allocation1] ss:$4 sm:$0xff] %v1210
        %v1213 = vld.sshfl [vmem:[#allocation1] sm:$0xff pattern:$0x73625140]
        %v1214 = vld.sshfl [vmem:[#allocation1 + $0x8] sm:$0xff pattern:$0x73625140]
        %v1217 = vmul.f32 %v1207, %v1213
        %v1218 = vmul.f32 %v1208, %v1214
        %v1219 = vadd.f32 %v1143, %v1217
        %v1220 = vadd.f32 %v1144, %v1218
        %1221 = vrot.lane.b32.xlu0 %v522, 97
        %v1222 = vpop.permute.xlu0 %1221
        %1223 = vrot.lane.b32.xlu0 %v523, 97
        %v1224 = vpop.permute.xlu0 %1223
        %vm1225 = vcmp.lt.s32.totalorder %v529, 97
        %v1226 = vsel %vm1225, %v1222, %v1224
        %v1227 = vsel %vm1225, %v1224, %v1222
        %s1228 = scalar_lea.vmem [#allocation2], 148
        %v1229 = vld [vmem:[%s1228] sm:$0xf]
        %1231 = vst [vmem:[#allocation1] ss:$4 sm:$0xff] %v1229
        %v1232 = vld.sshfl [vmem:[#allocation1] sm:$0xff pattern:$0x73625140]
        %v1233 = vld.sshfl [vmem:[#allocation1 + $0x8] sm:$0xff pattern:$0x73625140]
        %v1236 = vmul.f32 %v1226, %v1232
        %v1237 = vmul.f32 %v1227, %v1233
        %v1238 = vadd.f32 %v1162, %v1236
        %v1239 = vadd.f32 %v1163, %v1237
        %1240 = vrot.lane.b32.xlu0 %v522, 96
        %v1241 = vpop.permute.xlu0 %1240
        %1242 = vrot.lane.b32.xlu0 %v523, 96
        %v1243 = vpop.permute.xlu0 %1242
        %vm1244 = vcmp.lt.s32.totalorder %v529, 96
        %v1245 = vsel %vm1244, %v1241, %v1243
        %v1246 = vsel %vm1244, %v1243, %v1241
        %s1247 = scalar_lea.vmem [#allocation2], 152
        %v1248 = vld [vmem:[%s1247] sm:$0xf]
        %1250 = vst [vmem:[#allocation1] ss:$4 sm:$0xff] %v1248
        %v1251 = vld.sshfl [vmem:[#allocation1] sm:$0xff pattern:$0x73625140]
        %v1252 = vld.sshfl [vmem:[#allocation1 + $0x8] sm:$0xff pattern:$0x73625140]
        %v1255 = vmul.f32 %v1245, %v1251
        %v1256 = vmul.f32 %v1246, %v1252
        %v1257 = vadd.f32 %v1181, %v1255
        %v1258 = vadd.f32 %v1182, %v1256
        %1259 = vrot.lane.b32.xlu0 %v522, 95
        %v1260 = vpop.permute.xlu0 %1259
        %1261 = vrot.lane.b32.xlu0 %v523, 95
        %v1262 = vpop.permute.xlu0 %1261
        %vm1263 = vcmp.lt.s32.totalorder %v529, 95
        %v1264 = vsel %vm1263, %v1260, %v1262
        %v1265 = vsel %vm1263, %v1262, %v1260
        %s1266 = scalar_lea.vmem [#allocation2], 156
        %v1267 = vld [vmem:[%s1266] sm:$0xf]
        %1269 = vst [vmem:[#allocation1] ss:$4 sm:$0xff] %v1267
        %v1270 = vld.sshfl [vmem:[#allocation1] sm:$0xff pattern:$0x73625140]
        %v1271 = vld.sshfl [vmem:[#allocation1 + $0x8] sm:$0xff pattern:$0x73625140]
        %v1274 = vmul.f32 %v1264, %v1270
        %v1275 = vmul.f32 %v1265, %v1271
        %v1276 = vadd.f32 %v1200, %v1274
        %v1277 = vadd.f32 %v1201, %v1275
        %1278 = vrot.lane.b32.xlu0 %v522, 94
        %v1279 = vpop.permute.xlu0 %1278
        %1280 = vrot.lane.b32.xlu0 %v523, 94
        %v1281 = vpop.permute.xlu0 %1280
        %vm1282 = vcmp.lt.s32.totalorder %v529, 94
        %v1283 = vsel %vm1282, %v1279, %v1281
        %v1284 = vsel %vm1282, %v1281, %v1279
        %s1285 = scalar_lea.vmem [#allocation2], 160
        %v1286 = vld [vmem:[%s1285] sm:$0xf]
        %1288 = vst [vmem:[#allocation1] ss:$4 sm:$0xff] %v1286
        %v1289 = vld.sshfl [vmem:[#allocation1] sm:$0xff pattern:$0x73625140]
        %v1290 = vld.sshfl [vmem:[#allocation1 + $0x8] sm:$0xff pattern:$0x73625140]
        %v1293 = vmul.f32 %v1283, %v1289
        %v1294 = vmul.f32 %v1284, %v1290
        %v1295 = vadd.f32 %v1219, %v1293
        %v1296 = vadd.f32 %v1220, %v1294
        %1297 = vrot.lane.b32.xlu0 %v522, 93
        %v1298 = vpop.permute.xlu0 %1297
        %1299 = vrot.lane.b32.xlu0 %v523, 93
        %v1300 = vpop.permute.xlu0 %1299
        %vm1301 = vcmp.lt.s32.totalorder %v529, 93
        %v1302 = vsel %vm1301, %v1298, %v1300
        %v1303 = vsel %vm1301, %v1300, %v1298
        %s1304 = scalar_lea.vmem [#allocation2], 164
        %v1305 = vld [vmem:[%s1304] sm:$0xf]
        %1307 = vst [vmem:[#allocation1] ss:$4 sm:$0xff] %v1305
        %v1308 = vld.sshfl [vmem:[#allocation1] sm:$0xff pattern:$0x73625140]
        %v1309 = vld.sshfl [vmem:[#allocation1 + $0x8] sm:$0xff pattern:$0x73625140]
        %v1312 = vmul.f32 %v1302, %v1308
        %v1313 = vmul.f32 %v1303, %v1309
        %v1314 = vadd.f32 %v1238, %v1312
        %v1315 = vadd.f32 %v1239, %v1313
        %1316 = vrot.lane.b32.xlu0 %v522, 83
        %v1317 = vpop.permute.xlu0 %1316
        %1318 = vrot.lane.b32.xlu0 %v523, 83
        %v1319 = vpop.permute.xlu0 %1318
        %vm1320 = vcmp.lt.s32.totalorder %v529, 83
        %v1321 = vsel %vm1320, %v1317, %v1319
        %v1322 = vsel %vm1320, %v1319, %v1317
        %s1323 = scalar_lea.vmem [#allocation2], 168
        %v1324 = vld [vmem:[%s1323] sm:$0xf]
        %1326 = vst [vmem:[#allocation1] ss:$4 sm:$0xff] %v1324
        %v1327 = vld.sshfl [vmem:[#allocation1] sm:$0xff pattern:$0x73625140]
        %v1328 = vld.sshfl [vmem:[#allocation1 + $0x8] sm:$0xff pattern:$0x73625140]
        %v1331 = vmul.f32 %v1321, %v1327
        %v1332 = vmul.f32 %v1322, %v1328
        %v1333 = vadd.f32 %v1257, %v1331
        %v1334 = vadd.f32 %v1258, %v1332
        %1335 = vrot.lane.b32.xlu0 %v522, 82
        %v1336 = vpop.permute.xlu0 %1335
        %1337 = vrot.lane.b32.xlu0 %v523, 82
        %v1338 = vpop.permute.xlu0 %1337
        %vm1339 = vcmp.lt.s32.totalorder %v529, 82
        %v1340 = vsel %vm1339, %v1336, %v1338
        %v1341 = vsel %vm1339, %v1338, %v1336
        %s1342 = scalar_lea.vmem [#allocation2], 172
        %v1343 = vld [vmem:[%s1342] sm:$0xf]
        %1345 = vst [vmem:[#allocation1] ss:$4 sm:$0xff] %v1343
        %v1346 = vld.sshfl [vmem:[#allocation1] sm:$0xff pattern:$0x73625140]
        %v1347 = vld.sshfl [vmem:[#allocation1 + $0x8] sm:$0xff pattern:$0x73625140]
        %v1350 = vmul.f32 %v1340, %v1346
        %v1351 = vmul.f32 %v1341, %v1347
        %v1352 = vadd.f32 %v1276, %v1350
        %v1353 = vadd.f32 %v1277, %v1351
        %1354 = vrot.lane.b32.xlu0 %v522, 81
        %v1355 = vpop.permute.xlu0 %1354
        %1356 = vrot.lane.b32.xlu0 %v523, 81
        %v1357 = vpop.permute.xlu0 %1356
        %vm1358 = vcmp.lt.s32.totalorder %v529, 81
        %v1359 = vsel %vm1358, %v1355, %v1357
        %v1360 = vsel %vm1358, %v1357, %v1355
        %s1361 = scalar_lea.vmem [#allocation2], 176
        %v1362 = vld [vmem:[%s1361] sm:$0xf]
        %1364 = vst [vmem:[#allocation1] ss:$4 sm:$0xff] %v1362
        %v1365 = vld.sshfl [vmem:[#allocation1] sm:$0xff pattern:$0x73625140]
        %v1366 = vld.sshfl [vmem:[#allocation1 + $0x8] sm:$0xff pattern:$0x73625140]
        %v1369 = vmul.f32 %v1359, %v1365
        %v1370 = vmul.f32 %v1360, %v1366
        %v1371 = vadd.f32 %v1295, %v1369
        %v1372 = vadd.f32 %v1296, %v1370
        %1373 = vrot.lane.b32.xlu0 %v522, 80
        %v1374 = vpop.permute.xlu0 %1373
        %1375 = vrot.lane.b32.xlu0 %v523, 80
        %v1376 = vpop.permute.xlu0 %1375
        %vm1377 = vcmp.lt.s32.totalorder %v529, 80
        %v1378 = vsel %vm1377, %v1374, %v1376
        %v1379 = vsel %vm1377, %v1376, %v1374
        %s1380 = scalar_lea.vmem [#allocation2], 180
        %v1381 = vld [vmem:[%s1380] sm:$0xf]
        %1383 = vst [vmem:[#allocation1] ss:$4 sm:$0xff] %v1381
        %v1384 = vld.sshfl [vmem:[#allocation1] sm:$0xff pattern:$0x73625140]
        %v1385 = vld.sshfl [vmem:[#allocation1 + $0x8] sm:$0xff pattern:$0x73625140]
        %v1388 = vmul.f32 %v1378, %v1384
        %v1389 = vmul.f32 %v1379, %v1385
        %v1390 = vadd.f32 %v1314, %v1388
        %v1391 = vadd.f32 %v1315, %v1389
        %1392 = vrot.lane.b32.xlu0 %v522, 79
        %v1393 = vpop.permute.xlu0 %1392
        %1394 = vrot.lane.b32.xlu0 %v523, 79
        %v1395 = vpop.permute.xlu0 %1394
        %vm1396 = vcmp.lt.s32.totalorder %v529, 79
        %v1397 = vsel %vm1396, %v1393, %v1395
        %v1398 = vsel %vm1396, %v1395, %v1393
        %s1399 = scalar_lea.vmem [#allocation2], 184
        %v1400 = vld [vmem:[%s1399] sm:$0xf]
        %1402 = vst [vmem:[#allocation1] ss:$4 sm:$0xff] %v1400
        %v1403 = vld.sshfl [vmem:[#allocation1] sm:$0xff pattern:$0x73625140]
        %v1404 = vld.sshfl [vmem:[#allocation1 + $0x8] sm:$0xff pattern:$0x73625140]
        %v1407 = vmul.f32 %v1397, %v1403
        %v1408 = vmul.f32 %v1398, %v1404
        %v1409 = vadd.f32 %v1333, %v1407
        %v1410 = vadd.f32 %v1334, %v1408
        %1411 = vrot.lane.b32.xlu0 %v522, 78
        %v1412 = vpop.permute.xlu0 %1411
        %1413 = vrot.lane.b32.xlu0 %v523, 78
        %v1414 = vpop.permute.xlu0 %1413
        %vm1415 = vcmp.lt.s32.totalorder %v529, 78
        %v1416 = vsel %vm1415, %v1412, %v1414
        %v1417 = vsel %vm1415, %v1414, %v1412
        %s1418 = scalar_lea.vmem [#allocation2], 188
        %v1419 = vld [vmem:[%s1418] sm:$0xf]
        %1421 = vst [vmem:[#allocation1] ss:$4 sm:$0xff] %v1419
        %v1422 = vld.sshfl [vmem:[#allocation1] sm:$0xff pattern:$0x73625140]
        %v1423 = vld.sshfl [vmem:[#allocation1 + $0x8] sm:$0xff pattern:$0x73625140]
        %v1426 = vmul.f32 %v1416, %v1422
        %v1427 = vmul.f32 %v1417, %v1423
        %v1428 = vadd.f32 %v1352, %v1426
        %v1429 = vadd.f32 %v1353, %v1427
        %1430 = vrot.lane.b32.xlu0 %v522, 77
        %v1431 = vpop.permute.xlu0 %1430
        %1432 = vrot.lane.b32.xlu0 %v523, 77
        %v1433 = vpop.permute.xlu0 %1432
        %vm1434 = vcmp.lt.s32.totalorder %v529, 77
        %v1435 = vsel %vm1434, %v1431, %v1433
        %v1436 = vsel %vm1434, %v1433, %v1431
        %s1437 = scalar_lea.vmem [#allocation2], 192
        %v1438 = vld [vmem:[%s1437] sm:$0xf]
        %1440 = vst [vmem:[#allocation1] ss:$4 sm:$0xff] %v1438
        %v1441 = vld.sshfl [vmem:[#allocation1] sm:$0xff pattern:$0x73625140]
        %v1442 = vld.sshfl [vmem:[#allocation1 + $0x8] sm:$0xff pattern:$0x73625140]
        %v1445 = vmul.f32 %v1435, %v1441
        %v1446 = vmul.f32 %v1436, %v1442
        %v1447 = vadd.f32 %v1371, %v1445
        %v1448 = vadd.f32 %v1372, %v1446
        %v1449 = vadd.f32 %v1447, %v1390
        %v1450 = vadd.f32 %v1448, %v1391
        %v1451 = vadd.f32 %v1449, %v1409
        %v1452 = vadd.f32 %v1450, %v1410
        %v1453 = vadd.f32 %v1451, %v1428
        %v1454 = vadd.f32 %v1452, %v1429
        %vm1455 = vcmask 1041408
        %v1456 = vsel %vm1455, %v1453, 0.0
        %v1457 = vrot.slane %v1456, 4
        %v1458 = vadd.f32 %v1456, %v1457
        %v1459 = vrot.slane %v1458, 2
        %v1460 = vadd.f32 %v1458, %v1459
        %v1461 = vrot.slane %v1460, 1
        %v1462 = vadd.f32 %v1460, %v1461
        %v1463 = vsel %vm1455, %v1454, 0.0
        %v1464 = vrot.slane %v1463, 4
        %v1465 = vadd.f32 %v1463, %v1464
        %v1466 = vrot.slane %v1465, 2
        %v1467 = vadd.f32 %v1465, %v1466
        %v1468 = vrot.slane %v1467, 1
        %v1469 = vadd.f32 %v1467, %v1468
        %v1470 = vxor.u32 %v1462, 2147483648
        %v1471 = vxor.u32 %v1469, 2147483648
        %v1472 = vmul.f32 %v1470, 1.442695
        %v1473 = vpow.pop %v1472
        %v1474 = vmul.f32 %v1471, 1.442695
        %v1475 = vpow.pop %v1474
        %v1476 = vadd.f32 %v1473, 1.0
        %v1477 = vadd.f32 %v1475, 1.0
        %v1478 = vrcp.pop %v1476
        %v1479 = vmul.f32 %v1476, %v1478
        %v1480 = vsub.f32 1.0, %v1479
        %v1481 = vmul.f32 %v1478, %v1480
        %v1482 = vadd.f32 %v1478, %v1481
        %vm1483 = vweird.f32 %v1476
        %vm1484 = vweird.f32 %v1478
        %vm1485 = vmor %vm1483, %vm1484
        %v1486 = vsel %vm1485, %v1478, %v1482
        %v1487 = vand.u32 2147483647, %v1476
        %vm1488 = vcmp.eq.f32.partialorder %v1487, 8.507059e+37
        %v1489 = vand.u32 %v1476, 2147483648
        %v1490 = vor.u32 1.1754944e-38, %v1489
        %v1491 = vsel %vm1488, %v1490, %v1486
        %v1492 = vmul.f32 1.0, %v1491
        %v1493 = vrcp.pop %v1477
        %v1494 = vmul.f32 %v1477, %v1493
        %v1495 = vsub.f32 1.0, %v1494
        %v1496 = vmul.f32 %v1493, %v1495
        %v1497 = vadd.f32 %v1493, %v1496
        %vm1498 = vweird.f32 %v1477
        %vm1499 = vweird.f32 %v1493
        %vm1500 = vmor %vm1498, %vm1499
        %v1501 = vsel %vm1500, %v1493, %v1497
        %v1502 = vand.u32 2147483647, %v1477
        %vm1503 = vcmp.eq.f32.partialorder %v1502, 8.507059e+37
        %v1504 = vand.u32 %v1477, 2147483648
        %v1505 = vor.u32 1.1754944e-38, %v1504
        %v1506 = vsel %vm1503, %v1505, %v1501
        %v1507 = vmul.f32 1.0, %v1506
        %v1508 = vmul.f32 %v468, %v1492
        %v1509 = vmul.f32 %v469, %v1507
        %v1510 = vmul.f32 %v470, %v1492
        %v1511 = vmul.f32 %v471, %v1507
        %v1512 = vmul.f32 %v472, %v1492
        %v1513 = vmul.f32 %v473, %v1507
        %v1514 = vmul.f32 %v474, %v1492
        %v1515 = vmul.f32 %v475, %v1507
        %1516 = vst [vmem:[%s234] sm:$0xff] %v1508
        %1517 = vst [vmem:[%s234 + $0x8] sm:$0xff] %v1509
        %1518 = vst [vmem:[%s234 + $0x10] sm:$0xff] %v1510
        %1519 = vst [vmem:[%s234 + $0x18] sm:$0xff] %v1511
        %1520 = vst [vmem:[%s234 + $0x20] sm:$0xff] %v1512
        %1521 = vst [vmem:[%s234 + $0x28] sm:$0xff] %v1513
        %1522 = vst [vmem:[%s234 + $0x30] sm:$0xff] %v1514
        %1523 = vst [vmem:[%s234 + $0x38] sm:$0xff] %v1515
        %s1524 = sand.u32 %s119, 1
        %s1525 = scalar_lea.sflag [#allocation4], %s1524
        %s1526 = sand.u32 %s119, 1
        %s1527 = smul.addr %s1526, 64
        %s1528 = scalar_lea.vmem [#allocation7], %s1527
        // Predicated region
        $region45: #{tpu_custom_call.1} parent=35 // pred_check
          %p1529 = pneg %p129
        $region46: #{tpu_custom_call.1} parent=35 // pred_check_branch
          %1531 = sbr.rel (%p1529) target = $region48
        $region47: #{tpu_custom_call.1} parent=35 // pred_region
          %1533 = vsyncadd %s1525, 0
          %s1534 = smul.addr %s22, 8
          %s1535 = smul.addr %s1534, 8
          %s1536 = scalar_lea.hbm %s4, %s1535
          %s1537 = sshll.u32 %s1528, 4
          %s1538 = int_to_ptr.vmem [resolvable:$true] %s1537
          %s1539 = sshll.u32 %s1536, 4
          %s1540 = int_to_ptr.hbm [resolvable:$true] %s1539
          %1545 = dma.vmem_to_hbm [thread:$0]  %s1538, 1024, %s1540, %s1525, 256, 256, 16
        $region48: #{tpu_custom_call.1} parent=35 // pred_fallthru
          _
      $region36: #{tpu_custom_call.1} parent=5 // pred_fallthru
        _
      %p1546 = scmp.le.s32.totalorder 2, %s17
      // Predicated region
      $region49: #{tpu_custom_call.1} parent=5 // pred_check
        %p1547 = pneg %p1546
      $region50: #{tpu_custom_call.1} parent=5 // pred_check_branch
        %1549 = sbr.rel (%p1547) target = $region52
      $region51: #{tpu_custom_call.1} parent=5 // pred_region
        %s1550 = ssub.s32 %s17, 2
        // Predicated region
        $region53: #{tpu_custom_call.1} parent=51 // pred_check
          %p1551 = pneg %p135
        $region54: #{tpu_custom_call.1} parent=51 // pred_check_branch
          %1553 = sbr.rel (%p1551) target = $region56
        $region55: #{tpu_custom_call.1} parent=51 // pred_region
          %s1554 = sand.u32 %s120, 1
          %s1555 = scalar_lea.sflag [#allocation4], %s1554
          %s1556 = sand.u32 %s120, 1
          %s1557 = smul.addr %s1556, 64
          %s1558 = scalar_lea.vmem [#allocation7], %s1557
          %1560 = dma.done %s1555, 1024
        $region56: #{tpu_custom_call.1} parent=51 // pred_fallthru
          _
      $region52: #{tpu_custom_call.1} parent=5 // pred_fallthru
        _
    $region6: #{tpu_custom_call.1} parent=1 // loop_footer
      %s21 = sadd.s32 1, %s17
    $region7: #{tpu_custom_call.1} parent=1 // loop_footer_branch
      %16 = sbr.rel target = $region3
    $region8: #{tpu_custom_call.1} parent=1 // loop_exit
      _
    %1561 = vsyncpa [#allocation3], 1
    %s1562 = scalar_lea.sflag [#allocation3], 1
    %1563 = vsyncpa %s1562, 1
    %1564 = vsyncpa [#allocation6], 1
    %s1565 = scalar_lea.sflag [#allocation6], 1
    %1566 = vsyncpa %s1565, 1
    %1567 = vsyncpa [#allocation4], 1
    %s1568 = scalar_lea.sflag [#allocation4], 1
    %1569 = vsyncpa %s1568, 1

</llo_original>
